<compile_context>
chip_gen: v6e
topology: v6e:2x2x1
jax: 0.10.0
libtpu: 0.0.40
codegen_flags: <defaults>
</compile_context>

<pallas_src>
import jax
import jax.numpy as jnp
from jax.experimental import pallas as pl
from jax.experimental.pallas import tpu as pltpu

_LANE = 128
_HIDDEN = (128, 256, 512)


def _round_up(x, m):
    return ((x + m - 1) // m) * m


def _leaky_relu(x, slope=0.2):
    return jnp.where(x > 0, x, slope * x)


def vanilla_generator_kernel(z_ref,
                             w1_ref, b1_ref,
                             w2_ref, b2_ref,
                             w3_ref, b3_ref,
                             w4_ref, b4_ref,
                             out_ref):
    # (tb, z_dim_p) tile of latents; cast to bf16 only for the MXU operands.
    x = z_ref[...].astype(jnp.bfloat16)

    # Layer 1: Linear(z_dim, 128) + LeakyReLU(0.2)
    h = jnp.dot(x, w1_ref[...], preferred_element_type=jnp.float32) + b1_ref[...]
    h = _leaky_relu(h)

    # Layer 2: Linear(128, 256) + LeakyReLU(0.2)
    h = jnp.dot(h.astype(jnp.bfloat16), w2_ref[...],
                preferred_element_type=jnp.float32) + b2_ref[...]
    h = _leaky_relu(h)

    # Layer 3: Linear(256, 512) + LeakyReLU(0.2)
    h = jnp.dot(h.astype(jnp.bfloat16), w3_ref[...],
                preferred_element_type=jnp.float32) + b3_ref[...]
    h = _leaky_relu(h)

    # Layer 4: Linear(512, output_dim_padded) + Tanh  (padded lanes are exactly 0
    # before tanh -> tanh(0)=0, sliced off in the wrapper).
    h = jnp.dot(h.astype(jnp.bfloat16), w4_ref[...],
                preferred_element_type=jnp.float32) + b4_ref[...]
    out_ref[...] = jnp.tanh(h).astype(out_ref.dtype)


def _pad2d(a, rows, cols, dtype):
    a = a.astype(dtype)
    pr, pc = rows - a.shape[0], cols - a.shape[1]
    if pr or pc:
        a = jnp.pad(a, ((0, pr), (0, pc)))
    return a


def vanilla_generator(z, params, *, batch_tile=256):
    """z: (B, z_dim) float32. params: dict of pre-transposed f32 weights/biases."""
    B, z_dim = z.shape
    out_dim = params["b4"].shape[-1]

    # --- padding so every matmul / store is (8,128)-lane dense ---------------
    z_dim_p = _round_up(z_dim, _LANE)
    out_dim_p = _round_up(out_dim, _LANE)

    # Batch tile: 128-aligned (full MXU rows); don't exceed the padded batch.
    tb = max(_LANE, _round_up(min(batch_tile, _round_up(B, _LANE)), _LANE))
    B_p = _round_up(B, tb)

    z_p = _pad2d(z, B_p, z_dim_p, jnp.float32)

    # Weights -> bf16 (MXU-native), biases stay f32 (added post-accumulation).
    w1 = _pad2d(params["w1"], z_dim_p, _HIDDEN[0], jnp.bfloat16)
    w2 = _pad2d(params["w2"], _HIDDEN[0], _HIDDEN[1], jnp.bfloat16)
    w3 = _pad2d(params["w3"], _HIDDEN[1], _HIDDEN[2], jnp.bfloat16)
    w4 = _pad2d(params["w4"], _HIDDEN[2], out_dim_p, jnp.bfloat16)
    b1 = _pad2d(params["b1"], 1, _HIDDEN[0], jnp.float32)
    b2 = _pad2d(params["b2"], 1, _HIDDEN[1], jnp.float32)
    b3 = _pad2d(params["b3"], 1, _HIDDEN[2], jnp.float32)
    b4 = _pad2d(params["b4"], 1, out_dim_p, jnp.float32)

    weights = (w1, b1, w2, b2, w3, b3, w4, b4)

    # Weight / bias specs: full array, same (0,0) block for every grid step
    # (DMA'd once, resident in VMEM across the whole batch loop).
    def full_spec(shape):
        return pl.BlockSpec(shape, lambda i: (0, 0))

    grid = (B_p // tb,)

    flops = 2 * B_p * (z_dim_p * _HIDDEN[0]
                       + _HIDDEN[0] * _HIDDEN[1]
                       + _HIDDEN[1] * _HIDDEN[2]
                       + _HIDDEN[2] * out_dim_p)
    bytes_accessed = (z_p.size * 4 + B_p * out_dim_p * 4
                      + sum(int(w.size) * w.dtype.itemsize for w in weights))
    cost = pl.CostEstimate(flops=flops,
                           transcendentals=B_p * out_dim_p,
                           bytes_accessed=bytes_accessed)

    out_p = pl.pallas_call(
        vanilla_generator_kernel,
        out_shape=jax.ShapeDtypeStruct((B_p, out_dim_p), jnp.float32),
        grid_spec=pltpu.PrefetchScalarGridSpec(
            num_scalar_prefetch=0,
            grid=grid,
            in_specs=[
                pl.BlockSpec((tb, z_dim_p), lambda i: (i, 0)),   # z tile
                full_spec(w1.shape), full_spec(b1.shape),
                full_spec(w2.shape), full_spec(b2.shape),
                full_spec(w3.shape), full_spec(b3.shape),
                full_spec(w4.shape), full_spec(b4.shape),
            ],
            out_specs=pl.BlockSpec((tb, out_dim_p), lambda i: (i, 0)),
        ),
        compiler_params=pltpu.CompilerParams(
            dimension_semantics=("parallel",)),   # batch axis shards across TCs (v7x)
        cost_estimate=cost,
    )(z_p, *weights)

    # Strip batch / output-feature padding.
    return out_p[:B, :out_dim]


def init_params(key, z_dim, output_dim):
    """Deterministic init mirroring nn.Linear default (uniform +-1/sqrt(fan_in)).
    Weights stored pre-transposed as (in_features, out_features); biases (1, out)."""
    dims = [z_dim, *_HIDDEN, output_dim]
    params = {}
    for idx in range(4):
        fan_in, fan_out = dims[idx], dims[idx + 1]
        key, kw, kb = jax.random.split(key, 3)
        bound = 1.0 / jnp.sqrt(fan_in)
        params[f"w{idx + 1}"] = jax.random.uniform(
            kw, (fan_in, fan_out), jnp.float32, -bound, bound)
        params[f"b{idx + 1}"] = jax.random.uniform(
            kb, (1, fan_out), jnp.float32, -bound, bound)
    return params


def reference_forward(z, params):
    """Plain-JAX f32 reference for correctness checking."""
    h = z
    for idx in range(1, 4):
        h = h @ params[f"w{idx}"] + params[f"b{idx}"]
        h = jnp.where(h > 0, h, 0.2 * h)
    h = h @ params["w4"] + params["b4"]
    return jnp.tanh(h)


if __name__ == "__main__":
    key = jax.random.PRNGKey(0)
    z_dim, output_dim, batch = 32, 64, 8

    kp, kz = jax.random.split(key)
    params = init_params(kp, z_dim, output_dim)
    z = jax.random.normal(kz, (batch, z_dim), jnp.float32)

    out = vanilla_generator(z, params)          # default batch_tile=256 (clamped to 128 here)
    out = jax.block_until_ready(out)

    ref = reference_forward(z, params)
    assert out.shape == (batch, output_dim)
    # bf16 MXU operands with f32 accumulation -> tolerance looser than pure f32.
    max_err = float(jnp.max(jnp.abs(out - ref)))
    assert max_err < 5e-2, f"max abs err {max_err}"

    print("KERNEL_OK")
</pallas_src>

<mosaic_0001>
module attributes {stable_mosaic.version = 11 : i64} {
  func.func @vanilla_generator_kernel(%arg0: i32, %arg1: memref<128x128xf32, #tpu.memory_space<vmem>>, %arg2: memref<128x128xbf16, #tpu.memory_space<vmem>>, %arg3: memref<1x128xf32, #tpu.memory_space<vmem>>, %arg4: memref<128x256xbf16, #tpu.memory_space<vmem>>, %arg5: memref<1x256xf32, #tpu.memory_space<vmem>>, %arg6: memref<256x512xbf16, #tpu.memory_space<vmem>>, %arg7: memref<1x512xf32, #tpu.memory_space<vmem>>, %arg8: memref<512x128xbf16, #tpu.memory_space<vmem>>, %arg9: memref<1x128xf32, #tpu.memory_space<vmem>>, %arg10: memref<128x128xf32, #tpu.memory_space<vmem>>) attributes {dimension_semantics = [#tpu.dimension_semantics<parallel>], iteration_bounds = array<i64: 1>, scalar_prefetch = 0 : i64, scratch_operands = 0 : i64, tpu.core_type = #tpu.core_type<tc>, window_params = [{transform_indices = @transform_0, window_bounds = array<i64: 128, 128>}, {pipeline_mode = #tpu.pipeline_mode<synchronous>, transform_indices = @transform_1, window_bounds = array<i64: 128, 128>}, {pipeline_mode = #tpu.pipeline_mode<synchronous>, transform_indices = @transform_2, window_bounds = array<i64: 1, 128>}, {pipeline_mode = #tpu.pipeline_mode<synchronous>, transform_indices = @transform_3, window_bounds = array<i64: 128, 256>}, {pipeline_mode = #tpu.pipeline_mode<synchronous>, transform_indices = @transform_4, window_bounds = array<i64: 1, 256>}, {pipeline_mode = #tpu.pipeline_mode<synchronous>, transform_indices = @transform_5, window_bounds = array<i64: 256, 512>}, {pipeline_mode = #tpu.pipeline_mode<synchronous>, transform_indices = @transform_6, window_bounds = array<i64: 1, 512>}, {pipeline_mode = #tpu.pipeline_mode<synchronous>, transform_indices = @transform_7, window_bounds = array<i64: 512, 128>}, {pipeline_mode = #tpu.pipeline_mode<synchronous>, transform_indices = @transform_8, window_bounds = array<i64: 1, 128>}, {transform_indices = @transform_9, window_bounds = array<i64: 128, 128>}]} {
    %c0 = arith.constant 0 : index
    %c0_0 = arith.constant 0 : index
    %0 = vector.load %arg1[%c0, %c0_0] : memref<128x128xf32, #tpu.memory_space<vmem>>, vector<128x128xf32>
    %1 = arith.truncf %0 : vector<128x128xf32> to vector<128x128xbf16>
    %c0_1 = arith.constant 0 : index
    %c0_2 = arith.constant 0 : index
    %2 = vector.load %arg2[%c0_1, %c0_2] : memref<128x128xbf16, #tpu.memory_space<vmem>>, vector<128x128xbf16>
    %cst = arith.constant dense<0.000000e+00> : vector<128x128xf32>
    %3 = tpu.matmul %1, %2, %cst {dimension_numbers = #tpu.dot_dimension_numbers<[1], [0], [0], [1], [0, 0, 1, 1], [], []>} : vector<128x128xbf16>, vector<128x128xbf16>, vector<128x128xf32> -> vector<128x128xf32>
    %c0_3 = arith.constant 0 : index
    %c0_4 = arith.constant 0 : index
    %4 = vector.load %arg3[%c0_3, %c0_4] : memref<1x128xf32, #tpu.memory_space<vmem>>, vector<1x128xf32>
    %5 = vector.broadcast %4 : vector<1x128xf32> to vector<128x128xf32>
    %6 = arith.addf %3, %5 : vector<128x128xf32>
    %cst_5 = arith.constant 0.000000e+00 : f32
    %7 = vector.broadcast %cst_5 : f32 to vector<128x128xf32>
    %8 = arith.cmpf ogt, %6, %7 : vector<128x128xf32>
    %cst_6 = arith.constant 2.000000e-01 : f32
    %9 = vector.broadcast %cst_6 : f32 to vector<128x128xf32>
    %10 = arith.mulf %9, %6 : vector<128x128xf32>
    %11 = arith.select %8, %6, %10 : vector<128x128xi1>, vector<128x128xf32>
    %12 = arith.truncf %11 : vector<128x128xf32> to vector<128x128xbf16>
    %c0_7 = arith.constant 0 : index
    %c0_8 = arith.constant 0 : index
    %13 = vector.load %arg4[%c0_7, %c0_8] : memref<128x256xbf16, #tpu.memory_space<vmem>>, vector<128x256xbf16>
    %cst_9 = arith.constant dense<0.000000e+00> : vector<128x256xf32>
    %14 = tpu.matmul %12, %13, %cst_9 {dimension_numbers = #tpu.dot_dimension_numbers<[1], [0], [0], [1], [0, 0, 1, 1], [], []>} : vector<128x128xbf16>, vector<128x256xbf16>, vector<128x256xf32> -> vector<128x256xf32>
    %c0_10 = arith.constant 0 : index
    %c0_11 = arith.constant 0 : index
    %15 = vector.load %arg5[%c0_10, %c0_11] : memref<1x256xf32, #tpu.memory_space<vmem>>, vector<1x256xf32>
    %16 = vector.broadcast %15 : vector<1x256xf32> to vector<128x256xf32>
    %17 = arith.addf %14, %16 : vector<128x256xf32>
    %cst_12 = arith.constant 0.000000e+00 : f32
    %18 = vector.broadcast %cst_12 : f32 to vector<128x256xf32>
    %19 = arith.cmpf ogt, %17, %18 : vector<128x256xf32>
    %cst_13 = arith.constant 2.000000e-01 : f32
    %20 = vector.broadcast %cst_13 : f32 to vector<128x256xf32>
    %21 = arith.mulf %20, %17 : vector<128x256xf32>
    %22 = arith.select %19, %17, %21 : vector<128x256xi1>, vector<128x256xf32>
    %23 = arith.truncf %22 : vector<128x256xf32> to vector<128x256xbf16>
    %c0_14 = arith.constant 0 : index
    %c0_15 = arith.constant 0 : index
    %24 = vector.load %arg6[%c0_14, %c0_15] : memref<256x512xbf16, #tpu.memory_space<vmem>>, vector<256x512xbf16>
    %cst_16 = arith.constant dense<0.000000e+00> : vector<128x512xf32>
    %25 = tpu.matmul %23, %24, %cst_16 {dimension_numbers = #tpu.dot_dimension_numbers<[1], [0], [0], [1], [0, 0, 1, 1], [], []>} : vector<128x256xbf16>, vector<256x512xbf16>, vector<128x512xf32> -> vector<128x512xf32>
    %c0_17 = arith.constant 0 : index
    %c0_18 = arith.constant 0 : index
    %26 = vector.load %arg7[%c0_17, %c0_18] : memref<1x512xf32, #tpu.memory_space<vmem>>, vector<1x512xf32>
    %27 = vector.broadcast %26 : vector<1x512xf32> to vector<128x512xf32>
    %28 = arith.addf %25, %27 : vector<128x512xf32>
    %cst_19 = arith.constant 0.000000e+00 : f32
    %29 = vector.broadcast %cst_19 : f32 to vector<128x512xf32>
    %30 = arith.cmpf ogt, %28, %29 : vector<128x512xf32>
    %cst_20 = arith.constant 2.000000e-01 : f32
    %31 = vector.broadcast %cst_20 : f32 to vector<128x512xf32>
    %32 = arith.mulf %31, %28 : vector<128x512xf32>
    %33 = arith.select %30, %28, %32 : vector<128x512xi1>, vector<128x512xf32>
    %34 = arith.truncf %33 : vector<128x512xf32> to vector<128x512xbf16>
    %c0_21 = arith.constant 0 : index
    %c0_22 = arith.constant 0 : index
    %35 = vector.load %arg8[%c0_21, %c0_22] : memref<512x128xbf16, #tpu.memory_space<vmem>>, vector<512x128xbf16>
    %cst_23 = arith.constant dense<0.000000e+00> : vector<128x128xf32>
    %36 = tpu.matmul %34, %35, %cst_23 {dimension_numbers = #tpu.dot_dimension_numbers<[1], [0], [0], [1], [0, 0, 1, 1], [], []>} : vector<128x512xbf16>, vector<512x128xbf16>, vector<128x128xf32> -> vector<128x128xf32>
    %c0_24 = arith.constant 0 : index
    %c0_25 = arith.constant 0 : index
    %37 = vector.load %arg9[%c0_24, %c0_25] : memref<1x128xf32, #tpu.memory_space<vmem>>, vector<1x128xf32>
    %38 = vector.broadcast %37 : vector<1x128xf32> to vector<128x128xf32>
    %39 = arith.addf %36, %38 : vector<128x128xf32>
    %40 = math.tanh %39 : vector<128x128xf32>
    %c0_26 = arith.constant 0 : index
    %c0_27 = arith.constant 0 : index
    %41 = vector.load %arg10[%c0_26, %c0_27] : memref<128x128xf32, #tpu.memory_space<vmem>>, vector<128x128xf32>
    tpu.vector_store %arg10[%c0_26, %c0_27], %40 {strides = array<i32>} : memref<128x128xf32, #tpu.memory_space<vmem>>, vector<128x128xf32>,
    return
  }
  func.func @transform_0(%arg0: i32) -> (i32, i32) {
    %c0_i32 = arith.constant 0 : i32
    %c0_i32_0 = arith.constant 0 : i32
    return %arg0, %c0_i32 : i32, i32
  }
  func.func @transform_1(%arg0: i32) -> (i32, i32) {
    %c0_i32 = arith.constant 0 : i32
    %c0_i32_0 = arith.constant 0 : i32
    %c0_i32_1 = arith.constant 0 : i32
    return %c0_i32, %c0_i32_0 : i32, i32
  }
  func.func @transform_2(%arg0: i32) -> (i32, i32) {
    %c0_i32 = arith.constant 0 : i32
    %c0_i32_0 = arith.constant 0 : i32
    %c0_i32_1 = arith.constant 0 : i32
    return %c0_i32, %c0_i32_0 : i32, i32
  }
  func.func @transform_3(%arg0: i32) -> (i32, i32) {
    %c0_i32 = arith.constant 0 : i32
    %c0_i32_0 = arith.constant 0 : i32
    %c0_i32_1 = arith.constant 0 : i32
    return %c0_i32, %c0_i32_0 : i32, i32
  }
  func.func @transform_4(%arg0: i32) -> (i32, i32) {
    %c0_i32 = arith.constant 0 : i32
    %c0_i32_0 = arith.constant 0 : i32
    %c0_i32_1 = arith.constant 0 : i32
    return %c0_i32, %c0_i32_0 : i32, i32
  }
  func.func @transform_5(%arg0: i32) -> (i32, i32) {
    %c0_i32 = arith.constant 0 : i32
    %c0_i32_0 = arith.constant 0 : i32
    %c0_i32_1 = arith.constant 0 : i32
    return %c0_i32, %c0_i32_0 : i32, i32
  }
  func.func @transform_6(%arg0: i32) -> (i32, i32) {
    %c0_i32 = arith.constant 0 : i32
    %c0_i32_0 = arith.constant 0 : i32
    %c0_i32_1 = arith.constant 0 : i32
    return %c0_i32, %c0_i32_0 : i32, i32
  }
  func.func @transform_7(%arg0: i32) -> (i32, i32) {
    %c0_i32 = arith.constant 0 : i32
    %c0_i32_0 = arith.constant 0 : i32
    %c0_i32_1 = arith.constant 0 : i32
    return %c0_i32, %c0_i32_0 : i32, i32
  }
  func.func @transform_8(%arg0: i32) -> (i32, i32) {
    %c0_i32 = arith.constant 0 : i32
    %c0_i32_0 = arith.constant 0 : i32
    %c0_i32_1 = arith.constant 0 : i32
    return %c0_i32, %c0_i32_0 : i32, i32
  }
  func.func @transform_9(%arg0: i32) -> (i32, i32) {
    %c0_i32 = arith.constant 0 : i32
    %c0_i32_0 = arith.constant 0 : i32
    return %arg0, %c0_i32 : i32, i32
  }
}

</mosaic_0001>

<llo_original>
// kernel: tpu_custom_call.1
$region0: #{tpu_custom_call.1}
  #allocation0 [shape = 'u32[]', space=smem, size = 0x4, offset = 0x4, fixed_abs, tag = 'smem constant byte address 0x4 - core index']
  #allocation1 [shape = 'u32[144,128]{1,0:T(1,128)}', space=vmem, size = 0x12000, scoped, tag = 'internal scratch']
  %s0 = inlined_call_operand.hbm [shape: f32[128,128], index: 0, kind: input, shape index: {}]
  %s1 = inlined_call_operand.hbm [shape: bf16[128,128], index: 1, kind: input, shape index: {}]
  %s2 = inlined_call_operand.vmem [shape: f32[1,128], index: 2, kind: input, shape index: {}]
  %s3 = inlined_call_operand.hbm [shape: bf16[128,256], index: 3, kind: input, shape index: {}]
  %s4 = inlined_call_operand.vmem [shape: f32[1,256], index: 4, kind: input, shape index: {}]
  %s5 = inlined_call_operand.hbm [shape: bf16[256,512], index: 5, kind: input, shape index: {}]
  %s6 = inlined_call_operand.vmem [shape: f32[1,512], index: 6, kind: input, shape index: {}]
  %s7 = inlined_call_operand.hbm [shape: bf16[512,128], index: 7, kind: input, shape index: {}]
  %s8 = inlined_call_operand.vmem [shape: f32[1,128], index: 8, kind: input, shape index: {}]
  %s9 = inlined_call_operand.hbm [shape: f32[128,128], index: 9, kind: output, shape index: {}]
  %s10 = sld [smem:[#allocation0]]
  $region66: #{tpu_custom_call.1} parent=0
    _
  %s12 = ssub.s32 1, %s10
  %s13 = scalar_select 0, %s12, %s10
  $region1: #{tpu_custom_call.1} parent=0
    #allocation2 [shape = 'u8[65536]{0}', space=vmem, size = 0x10000, scoped, tag = 'input window, operand 0, single buffered']
    #allocation3 [shape = 's32[1]{0}', space=sflag, size = 0x4, scoped, tag = 'scoped memory for tpu_custom_call.1']
    #allocation4 [shape = 's32[1]{0}', space=sflag, size = 0x4, scoped, tag = 'scoped memory for tpu_custom_call.1']
    #allocation5 [shape = 'u8[32768]{0}', space=vmem, size = 0x8000, scoped, tag = 'input window, operand 1, single buffered']
    #allocation6 [shape = 's32[1]{0}', space=sflag, size = 0x4, scoped, tag = 'scoped memory for tpu_custom_call.1']
    #allocation7 [shape = 'u8[65536]{0}', space=vmem, size = 0x10000, scoped, tag = 'input window, operand 3, single buffered']
    #allocation8 [shape = 'u8[262144]{0}', space=vmem, size = 0x40000, scoped, tag = 'input window, operand 5, single buffered']
    #allocation9 [shape = 's32[1]{0}', space=sflag, size = 0x4, scoped, tag = 'scoped memory for tpu_custom_call.1']
    #allocation10 [shape = 'u8[131072]{0}', space=vmem, size = 0x20000, scoped, tag = 'input window, operand 7, single buffered']
    #allocation11 [shape = 'u8[65536]{0}', space=vmem, size = 0x10000, scoped, tag = 'output window, operand 0, single buffered']
    %14 = vsyncpa [#allocation3], 0
    %15 = vsyncpa [#allocation6], 0
    %16 = vsyncpa [#allocation9], 0
    %17 = vsyncpa [#allocation4], 0
    // Predicated region
    $region2: #{tpu_custom_call.1} parent=1 // pred_check
      _
    $region3: #{tpu_custom_call.1} parent=1 // pred_check_branch
      %19 = sbr.rel (0) target = $region5
    $region4: #{tpu_custom_call.1} parent=1 // pred_region
      %s21 = ssub.s32 2048, 2048
      %22 = vsyncadd [#allocation3], %s21
      %s23 = sshll.u32 [#allocation2], 4
      %s24 = int_to_ptr.vmem [resolvable:$true] %s23
      %29 = dma.hbm_to_vmem [thread:$0]  %s0, 2048, %s24, [#allocation3], 128, 128, 8
    $region5: #{tpu_custom_call.1} parent=1 // pred_fallthru
      _
    // Predicated region
    $region6: #{tpu_custom_call.1} parent=1 // pred_check
      _
    $region7: #{tpu_custom_call.1} parent=1 // pred_check_branch
      %31 = sbr.rel (0) target = $region9
    $region8: #{tpu_custom_call.1} parent=1 // pred_region
      %s33 = ssub.s32 1024, 1024
      %34 = vsyncadd [#allocation6], %s33
      %s35 = sshll.u32 [#allocation5], 4
      %s36 = int_to_ptr.vmem [resolvable:$true] %s35
      %41 = dma.hbm_to_vmem [thread:$0]  %s1, 1024, %s36, [#allocation6], 64, 64, 4
    $region9: #{tpu_custom_call.1} parent=1 // pred_fallthru
      _
    // Predicated region
    $region10: #{tpu_custom_call.1} parent=1 // pred_check
      _
    $region11: #{tpu_custom_call.1} parent=1 // pred_check_branch
      %43 = sbr.rel (0) target = $region13
    $region12: #{tpu_custom_call.1} parent=1 // pred_region
      _
    $region13: #{tpu_custom_call.1} parent=1 // pred_fallthru
      _
    // Predicated region
    $region14: #{tpu_custom_call.1} parent=1 // pred_check
      _
    $region15: #{tpu_custom_call.1} parent=1 // pred_check_branch
      %45 = sbr.rel (0) target = $region17
    $region16: #{tpu_custom_call.1} parent=1 // pred_region
      %s47 = ssub.s32 2048, 2048
      %48 = vsyncadd [#allocation6], %s47
      %s49 = sshll.u32 [#allocation7], 4
      %s50 = int_to_ptr.vmem [resolvable:$true] %s49
      %55 = dma.hbm_to_vmem [thread:$0]  %s3, 2048, %s50, [#allocation6], 128, 128, 8
    $region17: #{tpu_custom_call.1} parent=1 // pred_fallthru
      _
    // Predicated region
    $region18: #{tpu_custom_call.1} parent=1 // pred_check
      _
    $region19: #{tpu_custom_call.1} parent=1 // pred_check_branch
      %57 = sbr.rel (0) target = $region21
    $region20: #{tpu_custom_call.1} parent=1 // pred_region
      _
    $region21: #{tpu_custom_call.1} parent=1 // pred_fallthru
      _
    // Predicated region
    $region22: #{tpu_custom_call.1} parent=1 // pred_check
      _
    $region23: #{tpu_custom_call.1} parent=1 // pred_check_branch
      %59 = sbr.rel (0) target = $region25
    $region24: #{tpu_custom_call.1} parent=1 // pred_region
      %s61 = ssub.s32 8192, 8192
      %62 = vsyncadd [#allocation9], %s61
      %s63 = sshll.u32 [#allocation8], 4
      %s64 = int_to_ptr.vmem [resolvable:$true] %s63
      %69 = dma.hbm_to_vmem [thread:$0]  %s5, 8192, %s64, [#allocation9], 256, 256, 16
    $region25: #{tpu_custom_call.1} parent=1 // pred_fallthru
      _
    // Predicated region
    $region26: #{tpu_custom_call.1} parent=1 // pred_check
      _
    $region27: #{tpu_custom_call.1} parent=1 // pred_check_branch
      %71 = sbr.rel (0) target = $region29
    $region28: #{tpu_custom_call.1} parent=1 // pred_region
      _
    $region29: #{tpu_custom_call.1} parent=1 // pred_fallthru
      _
    // Predicated region
    $region30: #{tpu_custom_call.1} parent=1 // pred_check
      _
    $region31: #{tpu_custom_call.1} parent=1 // pred_check_branch
      %73 = sbr.rel (0) target = $region33
    $region32: #{tpu_custom_call.1} parent=1 // pred_region
      %s75 = ssub.s32 4096, 4096
      %76 = vsyncadd [#allocation9], %s75
      %s77 = sshll.u32 [#allocation10], 4
      %s78 = int_to_ptr.vmem [resolvable:$true] %s77
      %83 = dma.hbm_to_vmem [thread:$0]  %s7, 4096, %s78, [#allocation9], 64, 64, 4
    $region33: #{tpu_custom_call.1} parent=1 // pred_fallthru
      _
    // Predicated region
    $region34: #{tpu_custom_call.1} parent=1 // pred_check
      _
    $region35: #{tpu_custom_call.1} parent=1 // pred_check_branch
      %85 = sbr.rel (0) target = $region37
    $region36: #{tpu_custom_call.1} parent=1 // pred_region
      _
    $region37: #{tpu_custom_call.1} parent=1 // pred_fallthru
      _
    // Predicated region
    $region38: #{tpu_custom_call.1} parent=1 // pred_check
      _
    $region39: #{tpu_custom_call.1} parent=1 // pred_check_branch
      %87 = sbr.rel (0) target = $region41
    $region40: #{tpu_custom_call.1} parent=1 // pred_region
      %88 = dma.done [#allocation3], 2048
    $region41: #{tpu_custom_call.1} parent=1 // pred_fallthru
      _
    // Predicated region
    $region42: #{tpu_custom_call.1} parent=1 // pred_check
      _
    $region43: #{tpu_custom_call.1} parent=1 // pred_check_branch
      %90 = sbr.rel (0) target = $region45
    $region44: #{tpu_custom_call.1} parent=1 // pred_region
      %91 = dma.done [#allocation6], 1024
    $region45: #{tpu_custom_call.1} parent=1 // pred_fallthru
      _
    // Predicated region
    $region46: #{tpu_custom_call.1} parent=1 // pred_check
      _
    $region47: #{tpu_custom_call.1} parent=1 // pred_check_branch
      %93 = sbr.rel (0) target = $region49
    $region48: #{tpu_custom_call.1} parent=1 // pred_region
      %94 = dma.done [#allocation6], 2048
    $region49: #{tpu_custom_call.1} parent=1 // pred_fallthru
      _
    // Predicated region
    $region50: #{tpu_custom_call.1} parent=1 // pred_check
      _
    $region51: #{tpu_custom_call.1} parent=1 // pred_check_branch
      %96 = sbr.rel (0) target = $region53
    $region52: #{tpu_custom_call.1} parent=1 // pred_region
      %97 = dma.done [#allocation9], 8192
    $region53: #{tpu_custom_call.1} parent=1 // pred_fallthru
      _
    // Predicated region
    $region54: #{tpu_custom_call.1} parent=1 // pred_check
      _
    $region55: #{tpu_custom_call.1} parent=1 // pred_check_branch
      %99 = sbr.rel (0) target = $region57
    $region56: #{tpu_custom_call.1} parent=1 // pred_region
      %100 = dma.done [#allocation9], 4096
    $region57: #{tpu_custom_call.1} parent=1 // pred_fallthru
      _
    %v102 = vld [vmem:[#allocation2] sm:$0xff]
    %v103 = vld [vmem:[#allocation2 + $0x8] sm:$0xff]
    %v104 = vld [vmem:[#allocation2 + $0x10] sm:$0xff]
    %v105 = vld [vmem:[#allocation2 + $0x18] sm:$0xff]
    %v106 = vld [vmem:[#allocation2 + $0x20] sm:$0xff]
    %v107 = vld [vmem:[#allocation2 + $0x28] sm:$0xff]
    %v108 = vld [vmem:[#allocation2 + $0x30] sm:$0xff]
    %v109 = vld [vmem:[#allocation2 + $0x38] sm:$0xff]
    %v110 = vld [vmem:[#allocation2 + $0x40] sm:$0xff]
    %v111 = vld [vmem:[#allocation2 + $0x48] sm:$0xff]
    %v112 = vld [vmem:[#allocation2 + $0x50] sm:$0xff]
    %v113 = vld [vmem:[#allocation2 + $0x58] sm:$0xff]
    %v114 = vld [vmem:[#allocation2 + $0x60] sm:$0xff]
    %v115 = vld [vmem:[#allocation2 + $0x68] sm:$0xff]
    %v116 = vld [vmem:[#allocation2 + $0x70] sm:$0xff]
    %v117 = vld [vmem:[#allocation2 + $0x78] sm:$0xff]
    %v118 = vpack.c.bf16 %v103, %v102
    %v119 = vpack.c.bf16 %v105, %v104
    %v120 = vpack.c.bf16 %v107, %v106
    %v121 = vpack.c.bf16 %v109, %v108
    %v122 = vpack.c.bf16 %v111, %v110
    %v123 = vpack.c.bf16 %v113, %v112
    %v124 = vpack.c.bf16 %v115, %v114
    %v125 = vpack.c.bf16 %v117, %v116
    %v126 = vld [vmem:[#allocation5] sm:$0xf]
    %v127 = vld [vmem:[#allocation5 + $0x4] sm:$0xf]
    %v128 = vld [vmem:[#allocation5 + $0x8] sm:$0xf]
    %v129 = vld [vmem:[#allocation5 + $0xc] sm:$0xf]
    %v130 = vld [vmem:[#allocation5 + $0x10] sm:$0xf]
    %v131 = vld [vmem:[#allocation5 + $0x14] sm:$0xf]
    %v132 = vld [vmem:[#allocation5 + $0x18] sm:$0xf]
    %v133 = vld [vmem:[#allocation5 + $0x1c] sm:$0xf]
    %v134 = vld [vmem:[#allocation5 + $0x20] sm:$0xf]
    %v135 = vld [vmem:[#allocation5 + $0x24] sm:$0xf]
    %v136 = vld [vmem:[#allocation5 + $0x28] sm:$0xf]
    %v137 = vld [vmem:[#allocation5 + $0x2c] sm:$0xf]
    %v138 = vld [vmem:[#allocation5 + $0x30] sm:$0xf]
    %v139 = vld [vmem:[#allocation5 + $0x34] sm:$0xf]
    %v140 = vld [vmem:[#allocation5 + $0x38] sm:$0xf]
    %v141 = vld [vmem:[#allocation5 + $0x3c] sm:$0xf]
    %v142 = vld [vmem:[%s2] sm:$0x1]
    %v144 = vlaneseq
    %v145 = vshrl.u32 %v144, 7
    %v146 = vsub.s32 0, %v145
    %v147 = vrot.slane %v142, %v146
    %v165 = vunpack.c.l.b16 %v126
    %v166 = vunpack.c.l.b16 %v127
    %v167 = vunpack.c.l.b16 %v128
    %v168 = vunpack.c.l.b16 %v129
    %v169 = vunpack.c.l.b16 %v130
    %v170 = vunpack.c.l.b16 %v131
    %v171 = vunpack.c.l.b16 %v132
    %v172 = vunpack.c.l.b16 %v133
    %v173 = vunpack.c.l.b16 %v134
    %v174 = vunpack.c.l.b16 %v135
    %v175 = vunpack.c.l.b16 %v136
    %v176 = vunpack.c.l.b16 %v137
    %v177 = vunpack.c.l.b16 %v138
    %v178 = vunpack.c.l.b16 %v139
    %v179 = vunpack.c.l.b16 %v140
    %v180 = vunpack.c.l.b16 %v141
    %v181 = vpack.c.b16 %v166, %v165
    %v182 = vpack.c.b16 %v168, %v167
    %v183 = vpack.c.b16 %v170, %v169
    %v184 = vpack.c.b16 %v172, %v171
    %v185 = vpack.c.b16 %v174, %v173
    %v186 = vpack.c.b16 %v176, %v175
    %v187 = vpack.c.b16 %v178, %v177
    %v188 = vpack.c.b16 %v180, %v179
    %197 = vmatprep.subr.bf16.mxu0 0
    %198 = vmatpush1.bf16.msra.mxu0 %v188
    %199 = vmatprep.subr.bf16.mxu0 0
    %200 = vmatpush1.bf16.msra.mxu0 %v187
    %201 = vmatprep.subr.bf16.mxu0 0
    %202 = vmatpush1.bf16.msra.mxu0 %v186
    %203 = vmatprep.subr.bf16.mxu0 0
    %204 = vmatpush1.bf16.msra.mxu0 %v185
    %205 = vmatprep.subr.bf16.mxu0 0
    %206 = vmatpush1.bf16.msra.mxu0 %v184
    %207 = vmatprep.subr.bf16.mxu0 0
    %208 = vmatpush1.bf16.msra.mxu0 %v183
    %209 = vmatprep.subr.bf16.mxu0 0
    %210 = vmatpush1.bf16.msra.mxu0 %v182
    %211 = vmatprep.subr.bf16.mxu0 0
    %212 = vmatpush1.bf16.msra.mxu0 %v181
    %213 = vmatprep.subr.bf16.mxu0 0
    %214 = vmatpush2.bf16.msra.mxu0 0
    %215 = vmatprep.subr.bf16.mxu0 0
    %216 = vmatpush2.bf16.msra.mxu0 0
    %217 = vmatprep.subr.bf16.mxu0 0
    %218 = vmatpush2.bf16.msra.mxu0 0
    %219 = vmatprep.subr.bf16.mxu0 0
    %220 = vmatpush2.bf16.msra.mxu0 0
    %221 = vmatprep.subr.bf16.mxu0 0
    %222 = vmatpush2.bf16.msra.mxu0 0
    %223 = vmatprep.subr.bf16.mxu0 0
    %224 = vmatpush2.bf16.msra.mxu0 0
    %225 = vmatprep.subr.bf16.mxu0 0
    %226 = vmatpush2.bf16.msra.mxu0 0
    %227 = vmatprep.subr.bf16.mxu0 0
    %228 = vmatpush2.bf16.msra.mxu0 0
    %229 = vmatprep.mubr.bf16.mxu0 0
    %230 = vmatmul.mubr.bf16.gmra.mxu0 %v118
    %v231 = vpop.f32.mrf.mxu0
    %v232 = vadd.f32 %v147, %v231
    %v233 = vpop.f32.mrf.mxu0
    %v234 = vpop.f32.mrf.mxu0
    %v235 = vadd.f32 %v147, %v234
    %v236 = vpop.f32.mrf.mxu0
    %237 = vmatprep.mubr.bf16.mxu0 0
    %238 = vmatmul.mubr.bf16.gmra.mxu0 %v119
    %v239 = vpop.f32.mrf.mxu0
    %v240 = vadd.f32 %v147, %v239
    %v241 = vpop.f32.mrf.mxu0
    %v242 = vpop.f32.mrf.mxu0
    %v243 = vadd.f32 %v147, %v242
    %v244 = vpop.f32.mrf.mxu0
    %245 = vmatprep.mubr.bf16.mxu0 0
    %246 = vmatmul.mubr.bf16.gmra.mxu0 %v120
    %v247 = vpop.f32.mrf.mxu0
    %v248 = vadd.f32 %v147, %v247
    %v249 = vpop.f32.mrf.mxu0
    %v250 = vpop.f32.mrf.mxu0
    %v251 = vadd.f32 %v147, %v250
    %v252 = vpop.f32.mrf.mxu0
    %253 = vmatprep.mubr.bf16.mxu0 0
    %254 = vmatmul.mubr.bf16.gmra.mxu0 %v121
    %v255 = vpop.f32.mrf.mxu0
    %v256 = vadd.f32 %v147, %v255
    %v257 = vpop.f32.mrf.mxu0
    %v258 = vpop.f32.mrf.mxu0
    %v259 = vadd.f32 %v147, %v258
    %v260 = vpop.f32.mrf.mxu0
    %261 = vmatprep.mubr.bf16.mxu0 0
    %262 = vmatmul.mubr.bf16.gmra.mxu0 %v122
    %v263 = vpop.f32.mrf.mxu0
    %v264 = vadd.f32 %v147, %v263
    %v265 = vpop.f32.mrf.mxu0
    %v266 = vpop.f32.mrf.mxu0
    %v267 = vadd.f32 %v147, %v266
    %v268 = vpop.f32.mrf.mxu0
    %269 = vmatprep.mubr.bf16.mxu0 0
    %270 = vmatmul.mubr.bf16.gmra.mxu0 %v123
    %v271 = vpop.f32.mrf.mxu0
    %v272 = vadd.f32 %v147, %v271
    %v273 = vpop.f32.mrf.mxu0
    %v274 = vpop.f32.mrf.mxu0
    %v275 = vadd.f32 %v147, %v274
    %v276 = vpop.f32.mrf.mxu0
    %277 = vmatprep.mubr.bf16.mxu0 0
    %278 = vmatmul.mubr.bf16.gmra.mxu0 %v124
    %v279 = vpop.f32.mrf.mxu0
    %v280 = vadd.f32 %v147, %v279
    %v281 = vpop.f32.mrf.mxu0
    %v282 = vpop.f32.mrf.mxu0
    %v283 = vadd.f32 %v147, %v282
    %v284 = vpop.f32.mrf.mxu0
    %285 = vmatprep.mubr.bf16.mxu0 0
    %286 = vmatmul.mubr.bf16.gmra.mxu0 %v125
    %v287 = vpop.f32.mrf.mxu0
    %v288 = vadd.f32 %v147, %v287
    %v289 = vpop.f32.mrf.mxu0
    %v290 = vpop.f32.mrf.mxu0
    %v291 = vadd.f32 %v147, %v290
    %v292 = vpop.f32.mrf.mxu0
    %293 = vdwg.mxu0
    %vm294 = vcmp.gt.f32.partialorder %v232, 0.0
    %vm295 = vcmp.gt.f32.partialorder %v235, 0.0
    %vm296 = vcmp.gt.f32.partialorder %v240, 0.0
    %vm297 = vcmp.gt.f32.partialorder %v243, 0.0
    %vm298 = vcmp.gt.f32.partialorder %v248, 0.0
    %vm299 = vcmp.gt.f32.partialorder %v251, 0.0
    %vm300 = vcmp.gt.f32.partialorder %v256, 0.0
    %vm301 = vcmp.gt.f32.partialorder %v259, 0.0
    %vm302 = vcmp.gt.f32.partialorder %v264, 0.0
    %vm303 = vcmp.gt.f32.partialorder %v267, 0.0
    %vm304 = vcmp.gt.f32.partialorder %v272, 0.0
    %vm305 = vcmp.gt.f32.partialorder %v275, 0.0
    %vm306 = vcmp.gt.f32.partialorder %v280, 0.0
    %vm307 = vcmp.gt.f32.partialorder %v283, 0.0
    %vm308 = vcmp.gt.f32.partialorder %v288, 0.0
    %vm309 = vcmp.gt.f32.partialorder %v291, 0.0
    %v310 = vmul.f32 %v232, 0.2
    %v311 = vmul.f32 %v235, 0.2
    %v312 = vmul.f32 %v240, 0.2
    %v313 = vmul.f32 %v243, 0.2
    %v314 = vmul.f32 %v248, 0.2
    %v315 = vmul.f32 %v251, 0.2
    %v316 = vmul.f32 %v256, 0.2
    %v317 = vmul.f32 %v259, 0.2
    %v318 = vmul.f32 %v264, 0.2
    %v319 = vmul.f32 %v267, 0.2
    %v320 = vmul.f32 %v272, 0.2
    %v321 = vmul.f32 %v275, 0.2
    %v322 = vmul.f32 %v280, 0.2
    %v323 = vmul.f32 %v283, 0.2
    %v324 = vmul.f32 %v288, 0.2
    %v325 = vmul.f32 %v291, 0.2
    %v326 = vsel %vm294, %v232, %v310
    %v327 = vsel %vm295, %v235, %v311
    %v328 = vsel %vm296, %v240, %v312
    %v329 = vsel %vm297, %v243, %v313
    %v330 = vsel %vm298, %v248, %v314
    %v331 = vsel %vm299, %v251, %v315
    %v332 = vsel %vm300, %v256, %v316
    %v333 = vsel %vm301, %v259, %v317
    %v334 = vsel %vm302, %v264, %v318
    %v335 = vsel %vm303, %v267, %v319
    %v336 = vsel %vm304, %v272, %v320
    %v337 = vsel %vm305, %v275, %v321
    %v338 = vsel %vm306, %v280, %v322
    %v339 = vsel %vm307, %v283, %v323
    %v340 = vsel %vm308, %v288, %v324
    %v341 = vsel %vm309, %v291, %v325
    %v342 = vpack.c.bf16 %v327, %v326
    %v343 = vpack.c.bf16 %v329, %v328
    %v344 = vpack.c.bf16 %v331, %v330
    %v345 = vpack.c.bf16 %v333, %v332
    %v346 = vpack.c.bf16 %v335, %v334
    %v347 = vpack.c.bf16 %v337, %v336
    %v348 = vpack.c.bf16 %v339, %v338
    %v349 = vpack.c.bf16 %v341, %v340
    %v350 = vld [vmem:[#allocation7] sm:$0xff]
    %v351 = vld [vmem:[#allocation7 + $0x8] sm:$0xff]
    %v352 = vld [vmem:[#allocation7 + $0x10] sm:$0xff]
    %v353 = vld [vmem:[#allocation7 + $0x18] sm:$0xff]
    %v354 = vld [vmem:[#allocation7 + $0x20] sm:$0xff]
    %v355 = vld [vmem:[#allocation7 + $0x28] sm:$0xff]
    %v356 = vld [vmem:[#allocation7 + $0x30] sm:$0xff]
    %v357 = vld [vmem:[#allocation7 + $0x38] sm:$0xff]
    %v358 = vld [vmem:[#allocation7 + $0x40] sm:$0xff]
    %v359 = vld [vmem:[#allocation7 + $0x48] sm:$0xff]
    %v360 = vld [vmem:[#allocation7 + $0x50] sm:$0xff]
    %v361 = vld [vmem:[#allocation7 + $0x58] sm:$0xff]
    %v362 = vld [vmem:[#allocation7 + $0x60] sm:$0xff]
    %v363 = vld [vmem:[#allocation7 + $0x68] sm:$0xff]
    %v364 = vld [vmem:[#allocation7 + $0x70] sm:$0xff]
    %v365 = vld [vmem:[#allocation7 + $0x78] sm:$0xff]
    %v366 = vld [vmem:[%s4] sm:$0x3]
    %v368 = vlaneseq
    %v369 = vshrl.u32 %v368, 7
    %v370 = vsub.s32 0, %v369
    %v371 = vrot.slane %v366, %v370
    %v372 = vlaneseq
    %v373 = vshrl.u32 %v372, 7
    %v374 = vsub.s32 1, %v373
    %v375 = vrot.slane %v366, %v374
    %v394 = vunpack.c.l.b16 %v350
    %v395 = vunpack.c.h.b16 %v350
    %v396 = vunpack.c.l.b16 %v351
    %v397 = vunpack.c.h.b16 %v351
    %v398 = vunpack.c.l.b16 %v352
    %v399 = vunpack.c.h.b16 %v352
    %v400 = vunpack.c.l.b16 %v353
    %v401 = vunpack.c.h.b16 %v353
    %v402 = vunpack.c.l.b16 %v354
    %v403 = vunpack.c.h.b16 %v354
    %v404 = vunpack.c.l.b16 %v355
    %v405 = vunpack.c.h.b16 %v355
    %v406 = vunpack.c.l.b16 %v356
    %v407 = vunpack.c.h.b16 %v356
    %v408 = vunpack.c.l.b16 %v357
    %v409 = vunpack.c.h.b16 %v357
    %v410 = vunpack.c.l.b16 %v358
    %v411 = vunpack.c.h.b16 %v358
    %v412 = vunpack.c.l.b16 %v359
    %v413 = vunpack.c.h.b16 %v359
    %v414 = vunpack.c.l.b16 %v360
    %v415 = vunpack.c.h.b16 %v360
    %v416 = vunpack.c.l.b16 %v361
    %v417 = vunpack.c.h.b16 %v361
    %v418 = vunpack.c.l.b16 %v362
    %v419 = vunpack.c.h.b16 %v362
    %v420 = vunpack.c.l.b16 %v363
    %v421 = vunpack.c.h.b16 %v363
    %v422 = vunpack.c.l.b16 %v364
    %v423 = vunpack.c.h.b16 %v364
    %v424 = vunpack.c.l.b16 %v365
    %v425 = vunpack.c.h.b16 %v365
    %v426 = vpack.c.b16 %v396, %v394
    %v427 = vpack.c.b16 %v397, %v395
    %v428 = vpack.c.b16 %v400, %v398
    %v429 = vpack.c.b16 %v401, %v399
    %v430 = vpack.c.b16 %v404, %v402
    %v431 = vpack.c.b16 %v405, %v403
    %v432 = vpack.c.b16 %v408, %v406
    %v433 = vpack.c.b16 %v409, %v407
    %v434 = vpack.c.b16 %v412, %v410
    %v435 = vpack.c.b16 %v413, %v411
    %v436 = vpack.c.b16 %v416, %v414
    %v437 = vpack.c.b16 %v417, %v415
    %v438 = vpack.c.b16 %v420, %v418
    %v439 = vpack.c.b16 %v421, %v419
    %v440 = vpack.c.b16 %v424, %v422
    %v441 = vpack.c.b16 %v425, %v423
    %458 = vmatprep.subr.bf16.mxu0 %v441
    %459 = vmatpush1.bf16.msra.mxu0 %v440
    %460 = vmatprep.subr.bf16.mxu0 %v439
    %461 = vmatpush1.bf16.msra.mxu0 %v438
    %462 = vmatprep.subr.bf16.mxu0 %v437
    %463 = vmatpush1.bf16.msra.mxu0 %v436
    %464 = vmatprep.subr.bf16.mxu0 %v435
    %465 = vmatpush1.bf16.msra.mxu0 %v434
    %466 = vmatprep.subr.bf16.mxu0 %v433
    %467 = vmatpush1.bf16.msra.mxu0 %v432
    %468 = vmatprep.subr.bf16.mxu0 %v431
    %469 = vmatpush1.bf16.msra.mxu0 %v430
    %470 = vmatprep.subr.bf16.mxu0 %v429
    %471 = vmatpush1.bf16.msra.mxu0 %v428
    %472 = vmatprep.subr.bf16.mxu0 %v427
    %473 = vmatpush1.bf16.msra.mxu0 %v426
    %474 = vmatprep.subr.bf16.mxu0 0
    %475 = vmatpush2.bf16.msra.mxu0 0
    %476 = vmatprep.subr.bf16.mxu0 0
    %477 = vmatpush2.bf16.msra.mxu0 0
    %478 = vmatprep.subr.bf16.mxu0 0
    %479 = vmatpush2.bf16.msra.mxu0 0
    %480 = vmatprep.subr.bf16.mxu0 0
    %481 = vmatpush2.bf16.msra.mxu0 0
    %482 = vmatprep.subr.bf16.mxu0 0
    %483 = vmatpush2.bf16.msra.mxu0 0
    %484 = vmatprep.subr.bf16.mxu0 0
    %485 = vmatpush2.bf16.msra.mxu0 0
    %486 = vmatprep.subr.bf16.mxu0 0
    %487 = vmatpush2.bf16.msra.mxu0 0
    %488 = vmatprep.subr.bf16.mxu0 0
    %489 = vmatpush2.bf16.msra.mxu0 0
    %490 = vmatprep.mubr.bf16.mxu0 0
    %491 = vmatmul.mubr.bf16.gmra.mxu0 %v342
    %v492 = vpop.f32.mrf.mxu0
    %v493 = vadd.f32 %v371, %v492
    %v494 = vpop.f32.mrf.mxu0
    %v495 = vadd.f32 %v375, %v494
    %v496 = vpop.f32.mrf.mxu0
    %v497 = vadd.f32 %v371, %v496
    %v498 = vpop.f32.mrf.mxu0
    %v499 = vadd.f32 %v375, %v498
    %500 = vmatprep.mubr.bf16.mxu0 0
    %501 = vmatmul.mubr.bf16.gmra.mxu0 %v343
    %v502 = vpop.f32.mrf.mxu0
    %v503 = vadd.f32 %v371, %v502
    %v504 = vpop.f32.mrf.mxu0
    %v505 = vadd.f32 %v375, %v504
    %v506 = vpop.f32.mrf.mxu0
    %v507 = vadd.f32 %v371, %v506
    %v508 = vpop.f32.mrf.mxu0
    %v509 = vadd.f32 %v375, %v508
    %510 = vmatprep.mubr.bf16.mxu0 0
    %511 = vmatmul.mubr.bf16.gmra.mxu0 %v344
    %v512 = vpop.f32.mrf.mxu0
    %v513 = vadd.f32 %v371, %v512
    %v514 = vpop.f32.mrf.mxu0
    %v515 = vadd.f32 %v375, %v514
    %v516 = vpop.f32.mrf.mxu0
    %v517 = vadd.f32 %v371, %v516
    %v518 = vpop.f32.mrf.mxu0
    %v519 = vadd.f32 %v375, %v518
    %520 = vmatprep.mubr.bf16.mxu0 0
    %521 = vmatmul.mubr.bf16.gmra.mxu0 %v345
    %v522 = vpop.f32.mrf.mxu0
    %v523 = vadd.f32 %v371, %v522
    %v524 = vpop.f32.mrf.mxu0
    %v525 = vadd.f32 %v375, %v524
    %v526 = vpop.f32.mrf.mxu0
    %v527 = vadd.f32 %v371, %v526
    %v528 = vpop.f32.mrf.mxu0
    %v529 = vadd.f32 %v375, %v528
    %530 = vmatprep.mubr.bf16.mxu0 0
    %531 = vmatmul.mubr.bf16.gmra.mxu0 %v346
    %v532 = vpop.f32.mrf.mxu0
    %v533 = vadd.f32 %v371, %v532
    %v534 = vpop.f32.mrf.mxu0
    %v535 = vadd.f32 %v375, %v534
    %v536 = vpop.f32.mrf.mxu0
    %v537 = vadd.f32 %v371, %v536
    %v538 = vpop.f32.mrf.mxu0
    %v539 = vadd.f32 %v375, %v538
    %540 = vmatprep.mubr.bf16.mxu0 0
    %541 = vmatmul.mubr.bf16.gmra.mxu0 %v347
    %v542 = vpop.f32.mrf.mxu0
    %v543 = vadd.f32 %v371, %v542
    %v544 = vpop.f32.mrf.mxu0
    %v545 = vadd.f32 %v375, %v544
    %v546 = vpop.f32.mrf.mxu0
    %v547 = vadd.f32 %v371, %v546
    %v548 = vpop.f32.mrf.mxu0
    %v549 = vadd.f32 %v375, %v548
    %550 = vmatprep.mubr.bf16.mxu0 0
    %551 = vmatmul.mubr.bf16.gmra.mxu0 %v348
    %v552 = vpop.f32.mrf.mxu0
    %v553 = vadd.f32 %v371, %v552
    %v554 = vpop.f32.mrf.mxu0
    %v555 = vadd.f32 %v375, %v554
    %v556 = vpop.f32.mrf.mxu0
    %v557 = vadd.f32 %v371, %v556
    %v558 = vpop.f32.mrf.mxu0
    %v559 = vadd.f32 %v375, %v558
    %560 = vmatprep.mubr.bf16.mxu0 0
    %561 = vmatmul.mubr.bf16.gmra.mxu0 %v349
    %v562 = vpop.f32.mrf.mxu0
    %v563 = vadd.f32 %v371, %v562
    %v564 = vpop.f32.mrf.mxu0
    %v565 = vadd.f32 %v375, %v564
    %v566 = vpop.f32.mrf.mxu0
    %v567 = vadd.f32 %v371, %v566
    %v568 = vpop.f32.mrf.mxu0
    %v569 = vadd.f32 %v375, %v568
    %570 = vdwg.mxu0
    %vm571 = vcmp.gt.f32.partialorder %v493, 0.0
    %vm572 = vcmp.gt.f32.partialorder %v495, 0.0
    %vm573 = vcmp.gt.f32.partialorder %v497, 0.0
    %vm574 = vcmp.gt.f32.partialorder %v499, 0.0
    %vm575 = vcmp.gt.f32.partialorder %v503, 0.0
    %vm576 = vcmp.gt.f32.partialorder %v505, 0.0
    %vm577 = vcmp.gt.f32.partialorder %v507, 0.0
    %vm578 = vcmp.gt.f32.partialorder %v509, 0.0
    %vm579 = vcmp.gt.f32.partialorder %v513, 0.0
    %vm580 = vcmp.gt.f32.partialorder %v515, 0.0
    %vm581 = vcmp.gt.f32.partialorder %v517, 0.0
    %vm582 = vcmp.gt.f32.partialorder %v519, 0.0
    %vm583 = vcmp.gt.f32.partialorder %v523, 0.0
    %vm584 = vcmp.gt.f32.partialorder %v525, 0.0
    %vm585 = vcmp.gt.f32.partialorder %v527, 0.0
    %vm586 = vcmp.gt.f32.partialorder %v529, 0.0
    %vm587 = vcmp.gt.f32.partialorder %v533, 0.0
    %vm588 = vcmp.gt.f32.partialorder %v535, 0.0
    %vm589 = vcmp.gt.f32.partialorder %v537, 0.0
    %vm590 = vcmp.gt.f32.partialorder %v539, 0.0
    %vm591 = vcmp.gt.f32.partialorder %v543, 0.0
    %vm592 = vcmp.gt.f32.partialorder %v545, 0.0
    %vm593 = vcmp.gt.f32.partialorder %v547, 0.0
    %vm594 = vcmp.gt.f32.partialorder %v549, 0.0
    %vm595 = vcmp.gt.f32.partialorder %v553, 0.0
    %vm596 = vcmp.gt.f32.partialorder %v555, 0.0
    %vm597 = vcmp.gt.f32.partialorder %v557, 0.0
    %vm598 = vcmp.gt.f32.partialorder %v559, 0.0
    %vm599 = vcmp.gt.f32.partialorder %v563, 0.0
    %vm600 = vcmp.gt.f32.partialorder %v565, 0.0
    %vm601 = vcmp.gt.f32.partialorder %v567, 0.0
    %vm602 = vcmp.gt.f32.partialorder %v569, 0.0
    %v603 = vmul.f32 %v493, 0.2
    %v604 = vmul.f32 %v495, 0.2
    %v605 = vmul.f32 %v497, 0.2
    %v606 = vmul.f32 %v499, 0.2
    %v607 = vmul.f32 %v503, 0.2
    %v608 = vmul.f32 %v505, 0.2
    %v609 = vmul.f32 %v507, 0.2
    %v610 = vmul.f32 %v509, 0.2
    %v611 = vmul.f32 %v513, 0.2
    %v612 = vmul.f32 %v515, 0.2
    %v613 = vmul.f32 %v517, 0.2
    %v614 = vmul.f32 %v519, 0.2
    %v615 = vmul.f32 %v523, 0.2
    %v616 = vmul.f32 %v525, 0.2
    %v617 = vmul.f32 %v527, 0.2
    %v618 = vmul.f32 %v529, 0.2
    %v619 = vmul.f32 %v533, 0.2
    %v620 = vmul.f32 %v535, 0.2
    %v621 = vmul.f32 %v537, 0.2
    %v622 = vmul.f32 %v539, 0.2
    %v623 = vmul.f32 %v543, 0.2
    %v624 = vmul.f32 %v545, 0.2
    %v625 = vmul.f32 %v547, 0.2
    %v626 = vmul.f32 %v549, 0.2
    %v627 = vmul.f32 %v553, 0.2
    %v628 = vmul.f32 %v555, 0.2
    %v629 = vmul.f32 %v557, 0.2
    %v630 = vmul.f32 %v559, 0.2
    %v631 = vmul.f32 %v563, 0.2
    %v632 = vmul.f32 %v565, 0.2
    %v633 = vmul.f32 %v567, 0.2
    %v634 = vmul.f32 %v569, 0.2
    %v635 = vsel %vm571, %v493, %v603
    %v636 = vsel %vm572, %v495, %v604
    %v637 = vsel %vm573, %v497, %v605
    %v638 = vsel %vm574, %v499, %v606
    %v639 = vsel %vm575, %v503, %v607
    %v640 = vsel %vm576, %v505, %v608
    %v641 = vsel %vm577, %v507, %v609
    %v642 = vsel %vm578, %v509, %v610
    %v643 = vsel %vm579, %v513, %v611
    %v644 = vsel %vm580, %v515, %v612
    %v645 = vsel %vm581, %v517, %v613
    %v646 = vsel %vm582, %v519, %v614
    %v647 = vsel %vm583, %v523, %v615
    %v648 = vsel %vm584, %v525, %v616
    %v649 = vsel %vm585, %v527, %v617
    %v650 = vsel %vm586, %v529, %v618
    %v651 = vsel %vm587, %v533, %v619
    %v652 = vsel %vm588, %v535, %v620
    %v653 = vsel %vm589, %v537, %v621
    %v654 = vsel %vm590, %v539, %v622
    %v655 = vsel %vm591, %v543, %v623
    %v656 = vsel %vm592, %v545, %v624
    %v657 = vsel %vm593, %v547, %v625
    %v658 = vsel %vm594, %v549, %v626
    %v659 = vsel %vm595, %v553, %v627
    %v660 = vsel %vm596, %v555, %v628
    %v661 = vsel %vm597, %v557, %v629
    %v662 = vsel %vm598, %v559, %v630
    %v663 = vsel %vm599, %v563, %v631
    %v664 = vsel %vm600, %v565, %v632
    %v665 = vsel %vm601, %v567, %v633
    %v666 = vsel %vm602, %v569, %v634
    %v667 = vpack.c.bf16 %v637, %v635
    %v668 = vpack.c.bf16 %v638, %v636
    %v669 = vpack.c.bf16 %v641, %v639
    %v670 = vpack.c.bf16 %v642, %v640
    %v671 = vpack.c.bf16 %v645, %v643
    %v672 = vpack.c.bf16 %v646, %v644
    %v673 = vpack.c.bf16 %v649, %v647
    %v674 = vpack.c.bf16 %v650, %v648
    %v675 = vpack.c.bf16 %v653, %v651
    %v676 = vpack.c.bf16 %v654, %v652
    %v677 = vpack.c.bf16 %v657, %v655
    %v678 = vpack.c.bf16 %v658, %v656
    %v679 = vpack.c.bf16 %v661, %v659
    %v680 = vpack.c.bf16 %v662, %v660
    %v681 = vpack.c.bf16 %v665, %v663
    %v682 = vpack.c.bf16 %v666, %v664
    %v683 = vld [vmem:[#allocation8] sm:$0xff]
    %v684 = vld [vmem:[#allocation8 + $0x8] sm:$0xff]
    %v685 = vld [vmem:[#allocation8 + $0x10] sm:$0xff]
    %v686 = vld [vmem:[#allocation8 + $0x18] sm:$0xff]
    %v687 = vld [vmem:[#allocation8 + $0x20] sm:$0xff]
    %v688 = vld [vmem:[#allocation8 + $0x28] sm:$0xff]
    %v689 = vld [vmem:[#allocation8 + $0x30] sm:$0xff]
    %v690 = vld [vmem:[#allocation8 + $0x38] sm:$0xff]
    %v691 = vld [vmem:[#allocation8 + $0x40] sm:$0xff]
    %v692 = vld [vmem:[#allocation8 + $0x48] sm:$0xff]
    %v693 = vld [vmem:[#allocation8 + $0x50] sm:$0xff]
    %v694 = vld [vmem:[#allocation8 + $0x58] sm:$0xff]
    %v695 = vld [vmem:[#allocation8 + $0x60] sm:$0xff]
    %v696 = vld [vmem:[#allocation8 + $0x68] sm:$0xff]
    %v697 = vld [vmem:[#allocation8 + $0x70] sm:$0xff]
    %v698 = vld [vmem:[#allocation8 + $0x78] sm:$0xff]
    %v699 = vld [vmem:[#allocation8 + $0x80] sm:$0xff]
    %v700 = vld [vmem:[#allocation8 + $0x88] sm:$0xff]
    %v701 = vld [vmem:[#allocation8 + $0x90] sm:$0xff]
    %v702 = vld [vmem:[#allocation8 + $0x98] sm:$0xff]
    %v703 = vld [vmem:[#allocation8 + $0xa0] sm:$0xff]
    %v704 = vld [vmem:[#allocation8 + $0xa8] sm:$0xff]
    %v705 = vld [vmem:[#allocation8 + $0xb0] sm:$0xff]
    %v706 = vld [vmem:[#allocation8 + $0xb8] sm:$0xff]
    %v707 = vld [vmem:[#allocation8 + $0xc0] sm:$0xff]
    %v708 = vld [vmem:[#allocation8 + $0xc8] sm:$0xff]
    %v709 = vld [vmem:[#allocation8 + $0xd0] sm:$0xff]
    %v710 = vld [vmem:[#allocation8 + $0xd8] sm:$0xff]
    %v711 = vld [vmem:[#allocation8 + $0xe0] sm:$0xff]
    %v712 = vld [vmem:[#allocation8 + $0xe8] sm:$0xff]
    %v713 = vld [vmem:[#allocation8 + $0xf0] sm:$0xff]
    %v714 = vld [vmem:[#allocation8 + $0xf8] sm:$0xff]
    %v715 = vld [vmem:[#allocation8 + $0x100] sm:$0xff]
    %v716 = vld [vmem:[#allocation8 + $0x108] sm:$0xff]
    %v717 = vld [vmem:[#allocation8 + $0x110] sm:$0xff]
    %v718 = vld [vmem:[#allocation8 + $0x118] sm:$0xff]
    %v719 = vld [vmem:[#allocation8 + $0x120] sm:$0xff]
    %v720 = vld [vmem:[#allocation8 + $0x128] sm:$0xff]
    %v721 = vld [vmem:[#allocation8 + $0x130] sm:$0xff]
    %v722 = vld [vmem:[#allocation8 + $0x138] sm:$0xff]
    %v723 = vld [vmem:[#allocation8 + $0x140] sm:$0xff]
    %v724 = vld [vmem:[#allocation8 + $0x148] sm:$0xff]
    %v725 = vld [vmem:[#allocation8 + $0x150] sm:$0xff]
    %v726 = vld [vmem:[#allocation8 + $0x158] sm:$0xff]
    %v727 = vld [vmem:[#allocation8 + $0x160] sm:$0xff]
    %v728 = vld [vmem:[#allocation8 + $0x168] sm:$0xff]
    %v729 = vld [vmem:[#allocation8 + $0x170] sm:$0xff]
    %v730 = vld [vmem:[#allocation8 + $0x178] sm:$0xff]
    %v731 = vld [vmem:[#allocation8 + $0x180] sm:$0xff]
    %v732 = vld [vmem:[#allocation8 + $0x188] sm:$0xff]
    %v733 = vld [vmem:[#allocation8 + $0x190] sm:$0xff]
    %v734 = vld [vmem:[#allocation8 + $0x198] sm:$0xff]
    %v735 = vld [vmem:[#allocation8 + $0x1a0] sm:$0xff]
    %v736 = vld [vmem:[#allocation8 + $0x1a8] sm:$0xff]
    %v737 = vld [vmem:[#allocation8 + $0x1b0] sm:$0xff]
    %v738 = vld [vmem:[#allocation8 + $0x1b8] sm:$0xff]
    %v739 = vld [vmem:[#allocation8 + $0x1c0] sm:$0xff]
    %v740 = vld [vmem:[#allocation8 + $0x1c8] sm:$0xff]
    %v741 = vld [vmem:[#allocation8 + $0x1d0] sm:$0xff]
    %v742 = vld [vmem:[#allocation8 + $0x1d8] sm:$0xff]
    %v743 = vld [vmem:[#allocation8 + $0x1e0] sm:$0xff]
    %v744 = vld [vmem:[#allocation8 + $0x1e8] sm:$0xff]
    %v745 = vld [vmem:[#allocation8 + $0x1f0] sm:$0xff]
    %v746 = vld [vmem:[#allocation8 + $0x1f8] sm:$0xff]
    %v747 = vld [vmem:[%s6] sm:$0xf]
    %v749 = vlaneseq
    %v750 = vshrl.u32 %v749, 7
    %v751 = vsub.s32 0, %v750
    %v752 = vrot.slane %v747, %v751
    %v753 = vlaneseq
    %v754 = vshrl.u32 %v753, 7
    %v755 = vsub.s32 1, %v754
    %v756 = vrot.slane %v747, %v755
    %v757 = vlaneseq
    %v758 = vshrl.u32 %v757, 7
    %v759 = vsub.s32 2, %v758
    %v760 = vrot.slane %v747, %v759
    %v761 = vlaneseq
    %v762 = vshrl.u32 %v761, 7
    %v763 = vsub.s32 3, %v762
    %v764 = vrot.slane %v747, %v763
    %v833 = vunpack.c.l.b16 %v683
    %v834 = vunpack.c.h.b16 %v683
    %v835 = vunpack.c.l.b16 %v684
    %v836 = vunpack.c.h.b16 %v684
    %v837 = vunpack.c.l.b16 %v685
    %v838 = vunpack.c.h.b16 %v685
    %v839 = vunpack.c.l.b16 %v686
    %v840 = vunpack.c.h.b16 %v686
    %v841 = vunpack.c.l.b16 %v687
    %v842 = vunpack.c.h.b16 %v687
    %v843 = vunpack.c.l.b16 %v688
    %v844 = vunpack.c.h.b16 %v688
    %v845 = vunpack.c.l.b16 %v689
    %v846 = vunpack.c.h.b16 %v689
    %v847 = vunpack.c.l.b16 %v690
    %v848 = vunpack.c.h.b16 %v690
    %v849 = vunpack.c.l.b16 %v691
    %v850 = vunpack.c.h.b16 %v691
    %v851 = vunpack.c.l.b16 %v692
    %v852 = vunpack.c.h.b16 %v692
    %v853 = vunpack.c.l.b16 %v693
    %v854 = vunpack.c.h.b16 %v693
    %v855 = vunpack.c.l.b16 %v694
    %v856 = vunpack.c.h.b16 %v694
    %v857 = vunpack.c.l.b16 %v695
    %v858 = vunpack.c.h.b16 %v695
    %v859 = vunpack.c.l.b16 %v696
    %v860 = vunpack.c.h.b16 %v696
    %v861 = vunpack.c.l.b16 %v697
    %v862 = vunpack.c.h.b16 %v697
    %v863 = vunpack.c.l.b16 %v698
    %v864 = vunpack.c.h.b16 %v698
    %v865 = vunpack.c.l.b16 %v699
    %v866 = vunpack.c.h.b16 %v699
    %v867 = vunpack.c.l.b16 %v700
    %v868 = vunpack.c.h.b16 %v700
    %v869 = vunpack.c.l.b16 %v701
    %v870 = vunpack.c.h.b16 %v701
    %v871 = vunpack.c.l.b16 %v702
    %v872 = vunpack.c.h.b16 %v702
    %v873 = vunpack.c.l.b16 %v703
    %v874 = vunpack.c.h.b16 %v703
    %v875 = vunpack.c.l.b16 %v704
    %v876 = vunpack.c.h.b16 %v704
    %v877 = vunpack.c.l.b16 %v705
    %v878 = vunpack.c.h.b16 %v705
    %v879 = vunpack.c.l.b16 %v706
    %v880 = vunpack.c.h.b16 %v706
    %v881 = vunpack.c.l.b16 %v707
    %v882 = vunpack.c.h.b16 %v707
    %v883 = vunpack.c.l.b16 %v708
    %v884 = vunpack.c.h.b16 %v708
    %v885 = vunpack.c.l.b16 %v709
    %v886 = vunpack.c.h.b16 %v709
    %v887 = vunpack.c.l.b16 %v710
    %v888 = vunpack.c.h.b16 %v710
    %v889 = vunpack.c.l.b16 %v711
    %v890 = vunpack.c.h.b16 %v711
    %v891 = vunpack.c.l.b16 %v712
    %v892 = vunpack.c.h.b16 %v712
    %v893 = vunpack.c.l.b16 %v713
    %v894 = vunpack.c.h.b16 %v713
    %v895 = vunpack.c.l.b16 %v714
    %v896 = vunpack.c.h.b16 %v714
    %v897 = vunpack.c.l.b16 %v715
    %v898 = vunpack.c.h.b16 %v715
    %v899 = vunpack.c.l.b16 %v716
    %v900 = vunpack.c.h.b16 %v716
    %v901 = vunpack.c.l.b16 %v717
    %v902 = vunpack.c.h.b16 %v717
    %v903 = vunpack.c.l.b16 %v718
    %v904 = vunpack.c.h.b16 %v718
    %v905 = vunpack.c.l.b16 %v719
    %v906 = vunpack.c.h.b16 %v719
    %v907 = vunpack.c.l.b16 %v720
    %v908 = vunpack.c.h.b16 %v720
    %v909 = vunpack.c.l.b16 %v721
    %v910 = vunpack.c.h.b16 %v721
    %v911 = vunpack.c.l.b16 %v722
    %v912 = vunpack.c.h.b16 %v722
    %v913 = vunpack.c.l.b16 %v723
    %v914 = vunpack.c.h.b16 %v723
    %v915 = vunpack.c.l.b16 %v724
    %v916 = vunpack.c.h.b16 %v724
    %v917 = vunpack.c.l.b16 %v725
    %v918 = vunpack.c.h.b16 %v725
    %v919 = vunpack.c.l.b16 %v726
    %v920 = vunpack.c.h.b16 %v726
    %v921 = vunpack.c.l.b16 %v727
    %v922 = vunpack.c.h.b16 %v727
    %v923 = vunpack.c.l.b16 %v728
    %v924 = vunpack.c.h.b16 %v728
    %v925 = vunpack.c.l.b16 %v729
    %v926 = vunpack.c.h.b16 %v729
    %v927 = vunpack.c.l.b16 %v730
    %v928 = vunpack.c.h.b16 %v730
    %v929 = vunpack.c.l.b16 %v731
    %v930 = vunpack.c.h.b16 %v731
    %v931 = vunpack.c.l.b16 %v732
    %v932 = vunpack.c.h.b16 %v732
    %v933 = vunpack.c.l.b16 %v733
    %v934 = vunpack.c.h.b16 %v733
    %v935 = vunpack.c.l.b16 %v734
    %v936 = vunpack.c.h.b16 %v734
    %v937 = vunpack.c.l.b16 %v735
    %v938 = vunpack.c.h.b16 %v735
    %v939 = vunpack.c.l.b16 %v736
    %v940 = vunpack.c.h.b16 %v736
    %v941 = vunpack.c.l.b16 %v737
    %v942 = vunpack.c.h.b16 %v737
    %v943 = vunpack.c.l.b16 %v738
    %v944 = vunpack.c.h.b16 %v738
    %v945 = vunpack.c.l.b16 %v739
    %v946 = vunpack.c.h.b16 %v739
    %v947 = vunpack.c.l.b16 %v740
    %v948 = vunpack.c.h.b16 %v740
    %v949 = vunpack.c.l.b16 %v741
    %v950 = vunpack.c.h.b16 %v741
    %v951 = vunpack.c.l.b16 %v742
    %v952 = vunpack.c.h.b16 %v742
    %v953 = vunpack.c.l.b16 %v743
    %v954 = vunpack.c.h.b16 %v743
    %v955 = vunpack.c.l.b16 %v744
    %v956 = vunpack.c.h.b16 %v744
    %v957 = vunpack.c.l.b16 %v745
    %v958 = vunpack.c.h.b16 %v745
    %v959 = vunpack.c.l.b16 %v746
    %v960 = vunpack.c.h.b16 %v746
    %v961 = vpack.c.b16 %v837, %v833
    %v962 = vpack.c.b16 %v838, %v834
    %v963 = vpack.c.b16 %v839, %v835
    %v964 = vpack.c.b16 %v840, %v836
    %v965 = vpack.c.b16 %v845, %v841
    %v966 = vpack.c.b16 %v846, %v842
    %v967 = vpack.c.b16 %v847, %v843
    %v968 = vpack.c.b16 %v848, %v844
    %v969 = vpack.c.b16 %v853, %v849
    %v970 = vpack.c.b16 %v854, %v850
    %v971 = vpack.c.b16 %v855, %v851
    %v972 = vpack.c.b16 %v856, %v852
    %v973 = vpack.c.b16 %v861, %v857
    %v974 = vpack.c.b16 %v862, %v858
    %v975 = vpack.c.b16 %v863, %v859
    %v976 = vpack.c.b16 %v864, %v860
    %v977 = vpack.c.b16 %v869, %v865
    %v978 = vpack.c.b16 %v870, %v866
    %v979 = vpack.c.b16 %v871, %v867
    %v980 = vpack.c.b16 %v872, %v868
    %v981 = vpack.c.b16 %v877, %v873
    %v982 = vpack.c.b16 %v878, %v874
    %v983 = vpack.c.b16 %v879, %v875
    %v984 = vpack.c.b16 %v880, %v876
    %v985 = vpack.c.b16 %v885, %v881
    %v986 = vpack.c.b16 %v886, %v882
    %v987 = vpack.c.b16 %v887, %v883
    %v988 = vpack.c.b16 %v888, %v884
    %v989 = vpack.c.b16 %v893, %v889
    %v990 = vpack.c.b16 %v894, %v890
    %v991 = vpack.c.b16 %v895, %v891
    %v992 = vpack.c.b16 %v896, %v892
    %v993 = vpack.c.b16 %v901, %v897
    %v994 = vpack.c.b16 %v902, %v898
    %v995 = vpack.c.b16 %v903, %v899
    %v996 = vpack.c.b16 %v904, %v900
    %v997 = vpack.c.b16 %v909, %v905
    %v998 = vpack.c.b16 %v910, %v906
    %v999 = vpack.c.b16 %v911, %v907
    %v1000 = vpack.c.b16 %v912, %v908
    %v1001 = vpack.c.b16 %v917, %v913
    %v1002 = vpack.c.b16 %v918, %v914
    %v1003 = vpack.c.b16 %v919, %v915
    %v1004 = vpack.c.b16 %v920, %v916
    %v1005 = vpack.c.b16 %v925, %v921
    %v1006 = vpack.c.b16 %v926, %v922
    %v1007 = vpack.c.b16 %v927, %v923
    %v1008 = vpack.c.b16 %v928, %v924
    %v1009 = vpack.c.b16 %v933, %v929
    %v1010 = vpack.c.b16 %v934, %v930
    %v1011 = vpack.c.b16 %v935, %v931
    %v1012 = vpack.c.b16 %v936, %v932
    %v1013 = vpack.c.b16 %v941, %v937
    %v1014 = vpack.c.b16 %v942, %v938
    %v1015 = vpack.c.b16 %v943, %v939
    %v1016 = vpack.c.b16 %v944, %v940
    %v1017 = vpack.c.b16 %v949, %v945
    %v1018 = vpack.c.b16 %v950, %v946
    %v1019 = vpack.c.b16 %v951, %v947
    %v1020 = vpack.c.b16 %v952, %v948
    %v1021 = vpack.c.b16 %v957, %v953
    %v1022 = vpack.c.b16 %v958, %v954
    %v1023 = vpack.c.b16 %v959, %v955
    %v1024 = vpack.c.b16 %v960, %v956
    %1089 = vmatprep.subr.bf16.mxu0 %v990
    %1090 = vmatpush1.bf16.msra.mxu0 %v989
    %1091 = vmatprep.subr.bf16.mxu0 %v986
    %1092 = vmatpush1.bf16.msra.mxu0 %v985
    %1093 = vmatprep.subr.bf16.mxu0 %v982
    %1094 = vmatpush1.bf16.msra.mxu0 %v981
    %1095 = vmatprep.subr.bf16.mxu0 %v978
    %1096 = vmatpush1.bf16.msra.mxu0 %v977
    %1097 = vmatprep.subr.bf16.mxu0 %v974
    %1098 = vmatpush1.bf16.msra.mxu0 %v973
    %1099 = vmatprep.subr.bf16.mxu0 %v970
    %1100 = vmatpush1.bf16.msra.mxu0 %v969
    %1101 = vmatprep.subr.bf16.mxu0 %v966
    %1102 = vmatpush1.bf16.msra.mxu0 %v965
    %1103 = vmatprep.subr.bf16.mxu0 %v962
    %1104 = vmatpush1.bf16.msra.mxu0 %v961
    %1105 = vmatprep.subr.bf16.mxu0 %v1022
    %1106 = vmatpush2.bf16.msra.mxu0 %v1021
    %1107 = vmatprep.subr.bf16.mxu0 %v1018
    %1108 = vmatpush2.bf16.msra.mxu0 %v1017
    %1109 = vmatprep.subr.bf16.mxu0 %v1014
    %1110 = vmatpush2.bf16.msra.mxu0 %v1013
    %1111 = vmatprep.subr.bf16.mxu0 %v1010
    %1112 = vmatpush2.bf16.msra.mxu0 %v1009
    %1113 = vmatprep.subr.bf16.mxu0 %v1006
    %1114 = vmatpush2.bf16.msra.mxu0 %v1005
    %1115 = vmatprep.subr.bf16.mxu0 %v1002
    %1116 = vmatpush2.bf16.msra.mxu0 %v1001
    %1117 = vmatprep.subr.bf16.mxu0 %v998
    %1118 = vmatpush2.bf16.msra.mxu0 %v997
    %1119 = vmatprep.subr.bf16.mxu0 %v994
    %1120 = vmatpush2.bf16.msra.mxu0 %v993
    %1121 = vmatprep.mubr.bf16.mxu0 %v668
    %1122 = vmatmul.mubr.bf16.gmra.mxu0 %v667
    %v1123 = vpop.f32.mrf.mxu0
    %v1124 = vadd.f32 %v752, %v1123
    %v1125 = vpop.f32.mrf.mxu0
    %v1126 = vadd.f32 %v756, %v1125
    %v1127 = vpop.f32.mrf.mxu0
    %v1128 = vadd.f32 %v752, %v1127
    %v1129 = vpop.f32.mrf.mxu0
    %v1130 = vadd.f32 %v756, %v1129
    %1131 = vmatprep.mubr.bf16.mxu0 %v670
    %1132 = vmatmul.mubr.bf16.gmra.mxu0 %v669
    %v1133 = vpop.f32.mrf.mxu0
    %v1134 = vadd.f32 %v752, %v1133
    %v1135 = vpop.f32.mrf.mxu0
    %v1136 = vadd.f32 %v756, %v1135
    %v1137 = vpop.f32.mrf.mxu0
    %v1138 = vadd.f32 %v752, %v1137
    %v1139 = vpop.f32.mrf.mxu0
    %v1140 = vadd.f32 %v756, %v1139
    %1141 = vmatprep.mubr.bf16.mxu0 %v672
    %1142 = vmatmul.mubr.bf16.gmra.mxu0 %v671
    %v1143 = vpop.f32.mrf.mxu0
    %v1144 = vadd.f32 %v752, %v1143
    %v1145 = vpop.f32.mrf.mxu0
    %v1146 = vadd.f32 %v756, %v1145
    %v1147 = vpop.f32.mrf.mxu0
    %v1148 = vadd.f32 %v752, %v1147
    %v1149 = vpop.f32.mrf.mxu0
    %v1150 = vadd.f32 %v756, %v1149
    %1151 = vmatprep.mubr.bf16.mxu0 %v674
    %1152 = vmatmul.mubr.bf16.gmra.mxu0 %v673
    %v1153 = vpop.f32.mrf.mxu0
    %v1154 = vadd.f32 %v752, %v1153
    %v1155 = vpop.f32.mrf.mxu0
    %v1156 = vadd.f32 %v756, %v1155
    %v1157 = vpop.f32.mrf.mxu0
    %v1158 = vadd.f32 %v752, %v1157
    %v1159 = vpop.f32.mrf.mxu0
    %v1160 = vadd.f32 %v756, %v1159
    %1161 = vmatprep.mubr.bf16.mxu0 %v676
    %1162 = vmatmul.mubr.bf16.gmra.mxu0 %v675
    %v1163 = vpop.f32.mrf.mxu0
    %v1164 = vadd.f32 %v752, %v1163
    %v1165 = vpop.f32.mrf.mxu0
    %v1166 = vadd.f32 %v756, %v1165
    %v1167 = vpop.f32.mrf.mxu0
    %v1168 = vadd.f32 %v752, %v1167
    %v1169 = vpop.f32.mrf.mxu0
    %v1170 = vadd.f32 %v756, %v1169
    %1171 = vmatprep.mubr.bf16.mxu0 %v678
    %1172 = vmatmul.mubr.bf16.gmra.mxu0 %v677
    %v1173 = vpop.f32.mrf.mxu0
    %v1174 = vadd.f32 %v752, %v1173
    %v1175 = vpop.f32.mrf.mxu0
    %v1176 = vadd.f32 %v756, %v1175
    %v1177 = vpop.f32.mrf.mxu0
    %v1178 = vadd.f32 %v752, %v1177
    %v1179 = vpop.f32.mrf.mxu0
    %v1180 = vadd.f32 %v756, %v1179
    %1181 = vmatprep.mubr.bf16.mxu0 %v680
    %1182 = vmatmul.mubr.bf16.gmra.mxu0 %v679
    %v1183 = vpop.f32.mrf.mxu0
    %v1184 = vadd.f32 %v752, %v1183
    %v1185 = vpop.f32.mrf.mxu0
    %v1186 = vadd.f32 %v756, %v1185
    %v1187 = vpop.f32.mrf.mxu0
    %v1188 = vadd.f32 %v752, %v1187
    %v1189 = vpop.f32.mrf.mxu0
    %v1190 = vadd.f32 %v756, %v1189
    %1191 = vmatprep.mubr.bf16.mxu0 %v682
    %1192 = vmatmul.mubr.bf16.gmra.mxu0 %v681
    %v1193 = vpop.f32.mrf.mxu0
    %v1194 = vadd.f32 %v752, %v1193
    %v1195 = vpop.f32.mrf.mxu0
    %v1196 = vadd.f32 %v756, %v1195
    %v1197 = vpop.f32.mrf.mxu0
    %v1198 = vadd.f32 %v752, %v1197
    %v1199 = vpop.f32.mrf.mxu0
    %v1200 = vadd.f32 %v756, %v1199
    %1201 = vdwg.mxu0
    %1202 = vmatprep.subr.bf16.mxu0 %v992
    %1203 = vmatpush1.bf16.msra.mxu0 %v991
    %1204 = vmatprep.subr.bf16.mxu0 %v988
    %1205 = vmatpush1.bf16.msra.mxu0 %v987
    %1206 = vmatprep.subr.bf16.mxu0 %v984
    %1207 = vmatpush1.bf16.msra.mxu0 %v983
    %1208 = vmatprep.subr.bf16.mxu0 %v980
    %1209 = vmatpush1.bf16.msra.mxu0 %v979
    %1210 = vmatprep.subr.bf16.mxu0 %v976
    %1211 = vmatpush1.bf16.msra.mxu0 %v975
    %1212 = vmatprep.subr.bf16.mxu0 %v972
    %1213 = vmatpush1.bf16.msra.mxu0 %v971
    %1214 = vmatprep.subr.bf16.mxu0 %v968
    %1215 = vmatpush1.bf16.msra.mxu0 %v967
    %1216 = vmatprep.subr.bf16.mxu0 %v964
    %1217 = vmatpush1.bf16.msra.mxu0 %v963
    %1218 = vmatprep.subr.bf16.mxu0 %v1024
    %1219 = vmatpush2.bf16.msra.mxu0 %v1023
    %1220 = vmatprep.subr.bf16.mxu0 %v1020
    %1221 = vmatpush2.bf16.msra.mxu0 %v1019
    %1222 = vmatprep.subr.bf16.mxu0 %v1016
    %1223 = vmatpush2.bf16.msra.mxu0 %v1015
    %1224 = vmatprep.subr.bf16.mxu0 %v1012
    %1225 = vmatpush2.bf16.msra.mxu0 %v1011
    %1226 = vmatprep.subr.bf16.mxu0 %v1008
    %1227 = vmatpush2.bf16.msra.mxu0 %v1007
    %1228 = vmatprep.subr.bf16.mxu0 %v1004
    %1229 = vmatpush2.bf16.msra.mxu0 %v1003
    %1230 = vmatprep.subr.bf16.mxu0 %v1000
    %1231 = vmatpush2.bf16.msra.mxu0 %v999
    %1232 = vmatprep.subr.bf16.mxu0 %v996
    %1233 = vmatpush2.bf16.msra.mxu0 %v995
    %1234 = vmatprep.mubr.bf16.mxu0 %v668
    %1235 = vmatmul.mubr.bf16.gmra.mxu0 %v667
    %v1236 = vpop.f32.mrf.mxu0
    %v1237 = vadd.f32 %v760, %v1236
    %v1238 = vpop.f32.mrf.mxu0
    %v1239 = vadd.f32 %v764, %v1238
    %v1240 = vpop.f32.mrf.mxu0
    %v1241 = vadd.f32 %v760, %v1240
    %v1242 = vpop.f32.mrf.mxu0
    %v1243 = vadd.f32 %v764, %v1242
    %1244 = vmatprep.mubr.bf16.mxu0 %v670
    %1245 = vmatmul.mubr.bf16.gmra.mxu0 %v669
    %v1246 = vpop.f32.mrf.mxu0
    %v1247 = vadd.f32 %v760, %v1246
    %v1248 = vpop.f32.mrf.mxu0
    %v1249 = vadd.f32 %v764, %v1248
    %v1250 = vpop.f32.mrf.mxu0
    %v1251 = vadd.f32 %v760, %v1250
    %v1252 = vpop.f32.mrf.mxu0
    %v1253 = vadd.f32 %v764, %v1252
    %1254 = vmatprep.mubr.bf16.mxu0 %v672
    %1255 = vmatmul.mubr.bf16.gmra.mxu0 %v671
    %v1256 = vpop.f32.mrf.mxu0
    %v1257 = vadd.f32 %v760, %v1256
    %v1258 = vpop.f32.mrf.mxu0
    %v1259 = vadd.f32 %v764, %v1258
    %v1260 = vpop.f32.mrf.mxu0
    %v1261 = vadd.f32 %v760, %v1260
    %v1262 = vpop.f32.mrf.mxu0
    %v1263 = vadd.f32 %v764, %v1262
    %1264 = vmatprep.mubr.bf16.mxu0 %v674
    %1265 = vmatmul.mubr.bf16.gmra.mxu0 %v673
    %v1266 = vpop.f32.mrf.mxu0
    %v1267 = vadd.f32 %v760, %v1266
    %v1268 = vpop.f32.mrf.mxu0
    %v1269 = vadd.f32 %v764, %v1268
    %v1270 = vpop.f32.mrf.mxu0
    %v1271 = vadd.f32 %v760, %v1270
    %v1272 = vpop.f32.mrf.mxu0
    %v1273 = vadd.f32 %v764, %v1272
    %1274 = vmatprep.mubr.bf16.mxu0 %v676
    %1275 = vmatmul.mubr.bf16.gmra.mxu0 %v675
    %v1276 = vpop.f32.mrf.mxu0
    %v1277 = vadd.f32 %v760, %v1276
    %v1278 = vpop.f32.mrf.mxu0
    %v1279 = vadd.f32 %v764, %v1278
    %v1280 = vpop.f32.mrf.mxu0
    %v1281 = vadd.f32 %v760, %v1280
    %v1282 = vpop.f32.mrf.mxu0
    %v1283 = vadd.f32 %v764, %v1282
    %1284 = vmatprep.mubr.bf16.mxu0 %v678
    %1285 = vmatmul.mubr.bf16.gmra.mxu0 %v677
    %v1286 = vpop.f32.mrf.mxu0
    %v1287 = vadd.f32 %v760, %v1286
    %v1288 = vpop.f32.mrf.mxu0
    %v1289 = vadd.f32 %v764, %v1288
    %v1290 = vpop.f32.mrf.mxu0
    %v1291 = vadd.f32 %v760, %v1290
    %v1292 = vpop.f32.mrf.mxu0
    %v1293 = vadd.f32 %v764, %v1292
    %1294 = vmatprep.mubr.bf16.mxu0 %v680
    %1295 = vmatmul.mubr.bf16.gmra.mxu0 %v679
    %v1296 = vpop.f32.mrf.mxu0
    %v1297 = vadd.f32 %v760, %v1296
    %v1298 = vpop.f32.mrf.mxu0
    %v1299 = vadd.f32 %v764, %v1298
    %v1300 = vpop.f32.mrf.mxu0
    %v1301 = vadd.f32 %v760, %v1300
    %v1302 = vpop.f32.mrf.mxu0
    %v1303 = vadd.f32 %v764, %v1302
    %1304 = vmatprep.mubr.bf16.mxu0 %v682
    %1305 = vmatmul.mubr.bf16.gmra.mxu0 %v681
    %v1306 = vpop.f32.mrf.mxu0
    %v1307 = vadd.f32 %v760, %v1306
    %v1308 = vpop.f32.mrf.mxu0
    %v1309 = vadd.f32 %v764, %v1308
    %v1310 = vpop.f32.mrf.mxu0
    %v1311 = vadd.f32 %v760, %v1310
    %v1312 = vpop.f32.mrf.mxu0
    %v1313 = vadd.f32 %v764, %v1312
    %1314 = vdwg.mxu0
    %vm1315 = vcmp.gt.f32.partialorder %v1124, 0.0
    %vm1316 = vcmp.gt.f32.partialorder %v1126, 0.0
    %vm1317 = vcmp.gt.f32.partialorder %v1237, 0.0
    %vm1318 = vcmp.gt.f32.partialorder %v1239, 0.0
    %vm1319 = vcmp.gt.f32.partialorder %v1128, 0.0
    %vm1320 = vcmp.gt.f32.partialorder %v1130, 0.0
    %vm1321 = vcmp.gt.f32.partialorder %v1241, 0.0
    %vm1322 = vcmp.gt.f32.partialorder %v1243, 0.0
    %vm1323 = vcmp.gt.f32.partialorder %v1134, 0.0
    %vm1324 = vcmp.gt.f32.partialorder %v1136, 0.0
    %vm1325 = vcmp.gt.f32.partialorder %v1247, 0.0
    %vm1326 = vcmp.gt.f32.partialorder %v1249, 0.0
    %vm1327 = vcmp.gt.f32.partialorder %v1138, 0.0
    %vm1328 = vcmp.gt.f32.partialorder %v1140, 0.0
    %vm1329 = vcmp.gt.f32.partialorder %v1251, 0.0
    %vm1330 = vcmp.gt.f32.partialorder %v1253, 0.0
    %vm1331 = vcmp.gt.f32.partialorder %v1144, 0.0
    %vm1332 = vcmp.gt.f32.partialorder %v1146, 0.0
    %vm1333 = vcmp.gt.f32.partialorder %v1257, 0.0
    %vm1334 = vcmp.gt.f32.partialorder %v1259, 0.0
    %vm1335 = vcmp.gt.f32.partialorder %v1148, 0.0
    %vm1336 = vcmp.gt.f32.partialorder %v1150, 0.0
    %vm1337 = vcmp.gt.f32.partialorder %v1261, 0.0
    %vm1338 = vcmp.gt.f32.partialorder %v1263, 0.0
    %vm1339 = vcmp.gt.f32.partialorder %v1154, 0.0
    %vm1340 = vcmp.gt.f32.partialorder %v1156, 0.0
    %vm1341 = vcmp.gt.f32.partialorder %v1267, 0.0
    %vm1342 = vcmp.gt.f32.partialorder %v1269, 0.0
    %vm1343 = vcmp.gt.f32.partialorder %v1158, 0.0
    %vm1344 = vcmp.gt.f32.partialorder %v1160, 0.0
    %vm1345 = vcmp.gt.f32.partialorder %v1271, 0.0
    %vm1346 = vcmp.gt.f32.partialorder %v1273, 0.0
    %vm1347 = vcmp.gt.f32.partialorder %v1164, 0.0
    %vm1348 = vcmp.gt.f32.partialorder %v1166, 0.0
    %vm1349 = vcmp.gt.f32.partialorder %v1277, 0.0
    %vm1350 = vcmp.gt.f32.partialorder %v1279, 0.0
    %vm1351 = vcmp.gt.f32.partialorder %v1168, 0.0
    %vm1352 = vcmp.gt.f32.partialorder %v1170, 0.0
    %vm1353 = vcmp.gt.f32.partialorder %v1281, 0.0
    %vm1354 = vcmp.gt.f32.partialorder %v1283, 0.0
    %vm1355 = vcmp.gt.f32.partialorder %v1174, 0.0
    %vm1356 = vcmp.gt.f32.partialorder %v1176, 0.0
    %vm1357 = vcmp.gt.f32.partialorder %v1287, 0.0
    %vm1358 = vcmp.gt.f32.partialorder %v1289, 0.0
    %vm1359 = vcmp.gt.f32.partialorder %v1178, 0.0
    %vm1360 = vcmp.gt.f32.partialorder %v1180, 0.0
    %vm1361 = vcmp.gt.f32.partialorder %v1291, 0.0
    %vm1362 = vcmp.gt.f32.partialorder %v1293, 0.0
    %vm1363 = vcmp.gt.f32.partialorder %v1184, 0.0
    %vm1364 = vcmp.gt.f32.partialorder %v1186, 0.0
    %vm1365 = vcmp.gt.f32.partialorder %v1297, 0.0
    %vm1366 = vcmp.gt.f32.partialorder %v1299, 0.0
    %vm1367 = vcmp.gt.f32.partialorder %v1188, 0.0
    %vm1368 = vcmp.gt.f32.partialorder %v1190, 0.0
    %vm1369 = vcmp.gt.f32.partialorder %v1301, 0.0
    %vm1370 = vcmp.gt.f32.partialorder %v1303, 0.0
    %vm1371 = vcmp.gt.f32.partialorder %v1194, 0.0
    %vm1372 = vcmp.gt.f32.partialorder %v1196, 0.0
    %vm1373 = vcmp.gt.f32.partialorder %v1307, 0.0
    %vm1374 = vcmp.gt.f32.partialorder %v1309, 0.0
    %vm1375 = vcmp.gt.f32.partialorder %v1198, 0.0
    %vm1376 = vcmp.gt.f32.partialorder %v1200, 0.0
    %vm1377 = vcmp.gt.f32.partialorder %v1311, 0.0
    %vm1378 = vcmp.gt.f32.partialorder %v1313, 0.0
    %v1379 = vmul.f32 %v1124, 0.2
    %v1380 = vmul.f32 %v1126, 0.2
    %v1381 = vmul.f32 %v1237, 0.2
    %v1382 = vmul.f32 %v1239, 0.2
    %v1383 = vmul.f32 %v1128, 0.2
    %v1384 = vmul.f32 %v1130, 0.2
    %v1385 = vmul.f32 %v1241, 0.2
    %v1386 = vmul.f32 %v1243, 0.2
    %v1387 = vmul.f32 %v1134, 0.2
    %v1388 = vmul.f32 %v1136, 0.2
    %v1389 = vmul.f32 %v1247, 0.2
    %v1390 = vmul.f32 %v1249, 0.2
    %v1391 = vmul.f32 %v1138, 0.2
    %v1392 = vmul.f32 %v1140, 0.2
    %v1393 = vmul.f32 %v1251, 0.2
    %v1394 = vmul.f32 %v1253, 0.2
    %v1395 = vmul.f32 %v1144, 0.2
    %v1396 = vmul.f32 %v1146, 0.2
    %v1397 = vmul.f32 %v1257, 0.2
    %v1398 = vmul.f32 %v1259, 0.2
    %v1399 = vmul.f32 %v1148, 0.2
    %v1400 = vmul.f32 %v1150, 0.2
    %v1401 = vmul.f32 %v1261, 0.2
    %v1402 = vmul.f32 %v1263, 0.2
    %v1403 = vmul.f32 %v1154, 0.2
    %v1404 = vmul.f32 %v1156, 0.2
    %v1405 = vmul.f32 %v1267, 0.2
    %v1406 = vmul.f32 %v1269, 0.2
    %v1407 = vmul.f32 %v1158, 0.2
    %v1408 = vmul.f32 %v1160, 0.2
    %v1409 = vmul.f32 %v1271, 0.2
    %v1410 = vmul.f32 %v1273, 0.2
    %v1411 = vmul.f32 %v1164, 0.2
    %v1412 = vmul.f32 %v1166, 0.2
    %v1413 = vmul.f32 %v1277, 0.2
    %v1414 = vmul.f32 %v1279, 0.2
    %v1415 = vmul.f32 %v1168, 0.2
    %v1416 = vmul.f32 %v1170, 0.2
    %v1417 = vmul.f32 %v1281, 0.2
    %v1418 = vmul.f32 %v1283, 0.2
    %v1419 = vmul.f32 %v1174, 0.2
    %v1420 = vmul.f32 %v1176, 0.2
    %v1421 = vmul.f32 %v1287, 0.2
    %v1422 = vmul.f32 %v1289, 0.2
    %v1423 = vmul.f32 %v1178, 0.2
    %v1424 = vmul.f32 %v1180, 0.2
    %v1425 = vmul.f32 %v1291, 0.2
    %v1426 = vmul.f32 %v1293, 0.2
    %v1427 = vmul.f32 %v1184, 0.2
    %v1428 = vmul.f32 %v1186, 0.2
    %v1429 = vmul.f32 %v1297, 0.2
    %v1430 = vmul.f32 %v1299, 0.2
    %v1431 = vmul.f32 %v1188, 0.2
    %v1432 = vmul.f32 %v1190, 0.2
    %v1433 = vmul.f32 %v1301, 0.2
    %v1434 = vmul.f32 %v1303, 0.2
    %v1435 = vmul.f32 %v1194, 0.2
    %v1436 = vmul.f32 %v1196, 0.2
    %v1437 = vmul.f32 %v1307, 0.2
    %v1438 = vmul.f32 %v1309, 0.2
    %v1439 = vmul.f32 %v1198, 0.2
    %v1440 = vmul.f32 %v1200, 0.2
    %v1441 = vmul.f32 %v1311, 0.2
    %v1442 = vmul.f32 %v1313, 0.2
    %v1443 = vsel %vm1315, %v1124, %v1379
    %v1444 = vsel %vm1316, %v1126, %v1380
    %v1445 = vsel %vm1317, %v1237, %v1381
    %v1446 = vsel %vm1318, %v1239, %v1382
    %v1447 = vsel %vm1319, %v1128, %v1383
    %v1448 = vsel %vm1320, %v1130, %v1384
    %v1449 = vsel %vm1321, %v1241, %v1385
    %v1450 = vsel %vm1322, %v1243, %v1386
    %v1451 = vsel %vm1323, %v1134, %v1387
    %v1452 = vsel %vm1324, %v1136, %v1388
    %v1453 = vsel %vm1325, %v1247, %v1389
    %v1454 = vsel %vm1326, %v1249, %v1390
    %v1455 = vsel %vm1327, %v1138, %v1391
    %v1456 = vsel %vm1328, %v1140, %v1392
    %v1457 = vsel %vm1329, %v1251, %v1393
    %v1458 = vsel %vm1330, %v1253, %v1394
    %v1459 = vsel %vm1331, %v1144, %v1395
    %v1460 = vsel %vm1332, %v1146, %v1396
    %v1461 = vsel %vm1333, %v1257, %v1397
    %v1462 = vsel %vm1334, %v1259, %v1398
    %v1463 = vsel %vm1335, %v1148, %v1399
    %v1464 = vsel %vm1336, %v1150, %v1400
    %v1465 = vsel %vm1337, %v1261, %v1401
    %v1466 = vsel %vm1338, %v1263, %v1402
    %v1467 = vsel %vm1339, %v1154, %v1403
    %v1468 = vsel %vm1340, %v1156, %v1404
    %v1469 = vsel %vm1341, %v1267, %v1405
    %v1470 = vsel %vm1342, %v1269, %v1406
    %v1471 = vsel %vm1343, %v1158, %v1407
    %v1472 = vsel %vm1344, %v1160, %v1408
    %v1473 = vsel %vm1345, %v1271, %v1409
    %v1474 = vsel %vm1346, %v1273, %v1410
    %v1475 = vsel %vm1347, %v1164, %v1411
    %v1476 = vsel %vm1348, %v1166, %v1412
    %v1477 = vsel %vm1349, %v1277, %v1413
    %v1478 = vsel %vm1350, %v1279, %v1414
    %v1479 = vsel %vm1351, %v1168, %v1415
    %v1480 = vsel %vm1352, %v1170, %v1416
    %v1481 = vsel %vm1353, %v1281, %v1417
    %v1482 = vsel %vm1354, %v1283, %v1418
    %v1483 = vsel %vm1355, %v1174, %v1419
    %v1484 = vsel %vm1356, %v1176, %v1420
    %v1485 = vsel %vm1357, %v1287, %v1421
    %v1486 = vsel %vm1358, %v1289, %v1422
    %v1487 = vsel %vm1359, %v1178, %v1423
    %v1488 = vsel %vm1360, %v1180, %v1424
    %v1489 = vsel %vm1361, %v1291, %v1425
    %v1490 = vsel %vm1362, %v1293, %v1426
    %v1491 = vsel %vm1363, %v1184, %v1427
    %v1492 = vsel %vm1364, %v1186, %v1428
    %v1493 = vsel %vm1365, %v1297, %v1429
    %v1494 = vsel %vm1366, %v1299, %v1430
    %v1495 = vsel %vm1367, %v1188, %v1431
    %v1496 = vsel %vm1368, %v1190, %v1432
    %v1497 = vsel %vm1369, %v1301, %v1433
    %v1498 = vsel %vm1370, %v1303, %v1434
    %v1499 = vsel %vm1371, %v1194, %v1435
    %v1500 = vsel %vm1372, %v1196, %v1436
    %v1501 = vsel %vm1373, %v1307, %v1437
    %v1502 = vsel %vm1374, %v1309, %v1438
    %v1503 = vsel %vm1375, %v1198, %v1439
    %v1504 = vsel %vm1376, %v1200, %v1440
    %v1505 = vsel %vm1377, %v1311, %v1441
    %v1506 = vsel %vm1378, %v1313, %v1442
    %v1507 = vpack.c.bf16 %v1447, %v1443
    %v1508 = vpack.c.bf16 %v1448, %v1444
    %v1509 = vpack.c.bf16 %v1449, %v1445
    %v1510 = vpack.c.bf16 %v1450, %v1446
    %v1511 = vpack.c.bf16 %v1455, %v1451
    %v1512 = vpack.c.bf16 %v1456, %v1452
    %v1513 = vpack.c.bf16 %v1457, %v1453
    %v1514 = vpack.c.bf16 %v1458, %v1454
    %v1515 = vpack.c.bf16 %v1463, %v1459
    %v1516 = vpack.c.bf16 %v1464, %v1460
    %v1517 = vpack.c.bf16 %v1465, %v1461
    %v1518 = vpack.c.bf16 %v1466, %v1462
    %v1519 = vpack.c.bf16 %v1471, %v1467
    %v1520 = vpack.c.bf16 %v1472, %v1468
    %v1521 = vpack.c.bf16 %v1473, %v1469
    %v1522 = vpack.c.bf16 %v1474, %v1470
    %v1523 = vpack.c.bf16 %v1479, %v1475
    %v1524 = vpack.c.bf16 %v1480, %v1476
    %v1525 = vpack.c.bf16 %v1481, %v1477
    %v1526 = vpack.c.bf16 %v1482, %v1478
    %v1527 = vpack.c.bf16 %v1487, %v1483
    %v1528 = vpack.c.bf16 %v1488, %v1484
    %v1529 = vpack.c.bf16 %v1489, %v1485
    %v1530 = vpack.c.bf16 %v1490, %v1486
    %v1531 = vpack.c.bf16 %v1495, %v1491
    %v1532 = vpack.c.bf16 %v1496, %v1492
    %v1533 = vpack.c.bf16 %v1497, %v1493
    %v1534 = vpack.c.bf16 %v1498, %v1494
    %v1535 = vpack.c.bf16 %v1503, %v1499
    %v1536 = vpack.c.bf16 %v1504, %v1500
    %v1537 = vpack.c.bf16 %v1505, %v1501
    %v1538 = vpack.c.bf16 %v1506, %v1502
    %v1539 = vld [vmem:[#allocation10] sm:$0xf]
    %v1540 = vld [vmem:[#allocation10 + $0x4] sm:$0xf]
    %v1541 = vld [vmem:[#allocation10 + $0x8] sm:$0xf]
    %v1542 = vld [vmem:[#allocation10 + $0xc] sm:$0xf]
    %v1543 = vld [vmem:[#allocation10 + $0x10] sm:$0xf]
    %v1544 = vld [vmem:[#allocation10 + $0x14] sm:$0xf]
    %v1545 = vld [vmem:[#allocation10 + $0x18] sm:$0xf]
    %v1546 = vld [vmem:[#allocation10 + $0x1c] sm:$0xf]
    %v1547 = vld [vmem:[#allocation10 + $0x20] sm:$0xf]
    %v1548 = vld [vmem:[#allocation10 + $0x24] sm:$0xf]
    %v1549 = vld [vmem:[#allocation10 + $0x28] sm:$0xf]
    %v1550 = vld [vmem:[#allocation10 + $0x2c] sm:$0xf]
    %v1551 = vld [vmem:[#allocation10 + $0x30] sm:$0xf]
    %v1552 = vld [vmem:[#allocation10 + $0x34] sm:$0xf]
    %v1553 = vld [vmem:[#allocation10 + $0x38] sm:$0xf]
    %v1554 = vld [vmem:[#allocation10 + $0x3c] sm:$0xf]
    %v1555 = vld [vmem:[#allocation10 + $0x40] sm:$0xf]
    %v1556 = vld [vmem:[#allocation10 + $0x44] sm:$0xf]
    %v1557 = vld [vmem:[#allocation10 + $0x48] sm:$0xf]
    %v1558 = vld [vmem:[#allocation10 + $0x4c] sm:$0xf]
    %v1559 = vld [vmem:[#allocation10 + $0x50] sm:$0xf]
    %v1560 = vld [vmem:[#allocation10 + $0x54] sm:$0xf]
    %v1561 = vld [vmem:[#allocation10 + $0x58] sm:$0xf]
    %v1562 = vld [vmem:[#allocation10 + $0x5c] sm:$0xf]
    %v1563 = vld [vmem:[#allocation10 + $0x60] sm:$0xf]
    %v1564 = vld [vmem:[#allocation10 + $0x64] sm:$0xf]
    %v1565 = vld [vmem:[#allocation10 + $0x68] sm:$0xf]
    %v1566 = vld [vmem:[#allocation10 + $0x6c] sm:$0xf]
    %v1567 = vld [vmem:[#allocation10 + $0x70] sm:$0xf]
    %v1568 = vld [vmem:[#allocation10 + $0x74] sm:$0xf]
    %v1569 = vld [vmem:[#allocation10 + $0x78] sm:$0xf]
    %v1570 = vld [vmem:[#allocation10 + $0x7c] sm:$0xf]
    %v1571 = vld [vmem:[#allocation10 + $0x80] sm:$0xf]
    %v1572 = vld [vmem:[#allocation10 + $0x84] sm:$0xf]
    %v1573 = vld [vmem:[#allocation10 + $0x88] sm:$0xf]
    %v1574 = vld [vmem:[#allocation10 + $0x8c] sm:$0xf]
    %v1575 = vld [vmem:[#allocation10 + $0x90] sm:$0xf]
    %v1576 = vld [vmem:[#allocation10 + $0x94] sm:$0xf]
    %v1577 = vld [vmem:[#allocation10 + $0x98] sm:$0xf]
    %v1578 = vld [vmem:[#allocation10 + $0x9c] sm:$0xf]
    %v1579 = vld [vmem:[#allocation10 + $0xa0] sm:$0xf]
    %v1580 = vld [vmem:[#allocation10 + $0xa4] sm:$0xf]
    %v1581 = vld [vmem:[#allocation10 + $0xa8] sm:$0xf]
    %v1582 = vld [vmem:[#allocation10 + $0xac] sm:$0xf]
    %v1583 = vld [vmem:[#allocation10 + $0xb0] sm:$0xf]
    %v1584 = vld [vmem:[#allocation10 + $0xb4] sm:$0xf]
    %v1585 = vld [vmem:[#allocation10 + $0xb8] sm:$0xf]
    %v1586 = vld [vmem:[#allocation10 + $0xbc] sm:$0xf]
    %v1587 = vld [vmem:[#allocation10 + $0xc0] sm:$0xf]
    %v1588 = vld [vmem:[#allocation10 + $0xc4] sm:$0xf]
    %v1589 = vld [vmem:[#allocation10 + $0xc8] sm:$0xf]
    %v1590 = vld [vmem:[#allocation10 + $0xcc] sm:$0xf]
    %v1591 = vld [vmem:[#allocation10 + $0xd0] sm:$0xf]
    %v1592 = vld [vmem:[#allocation10 + $0xd4] sm:$0xf]
    %v1593 = vld [vmem:[#allocation10 + $0xd8] sm:$0xf]
    %v1594 = vld [vmem:[#allocation10 + $0xdc] sm:$0xf]
    %v1595 = vld [vmem:[#allocation10 + $0xe0] sm:$0xf]
    %v1596 = vld [vmem:[#allocation10 + $0xe4] sm:$0xf]
    %v1597 = vld [vmem:[#allocation10 + $0xe8] sm:$0xf]
    %v1598 = vld [vmem:[#allocation10 + $0xec] sm:$0xf]
    %v1599 = vld [vmem:[#allocation10 + $0xf0] sm:$0xf]
    %v1600 = vld [vmem:[#allocation10 + $0xf4] sm:$0xf]
    %v1601 = vld [vmem:[#allocation10 + $0xf8] sm:$0xf]
    %v1602 = vld [vmem:[#allocation10 + $0xfc] sm:$0xf]
    %v1603 = vld [vmem:[%s8] sm:$0x1]
    %v1605 = vlaneseq
    %v1606 = vshrl.u32 %v1605, 7
    %v1607 = vsub.s32 0, %v1606
    %v1608 = vrot.slane %v1603, %v1607
    %v1674 = vunpack.c.l.b16 %v1539
    %v1675 = vunpack.c.l.b16 %v1540
    %v1676 = vunpack.c.l.b16 %v1541
    %v1677 = vunpack.c.l.b16 %v1542
    %v1678 = vunpack.c.l.b16 %v1543
    %v1679 = vunpack.c.l.b16 %v1544
    %v1680 = vunpack.c.l.b16 %v1545
    %v1681 = vunpack.c.l.b16 %v1546
    %v1682 = vunpack.c.l.b16 %v1547
    %v1683 = vunpack.c.l.b16 %v1548
    %v1684 = vunpack.c.l.b16 %v1549
    %v1685 = vunpack.c.l.b16 %v1550
    %v1686 = vunpack.c.l.b16 %v1551
    %v1687 = vunpack.c.l.b16 %v1552
    %v1688 = vunpack.c.l.b16 %v1553
    %v1689 = vunpack.c.l.b16 %v1554
    %v1690 = vunpack.c.l.b16 %v1555
    %v1691 = vunpack.c.l.b16 %v1556
    %v1692 = vunpack.c.l.b16 %v1557
    %v1693 = vunpack.c.l.b16 %v1558
    %v1694 = vunpack.c.l.b16 %v1559
    %v1695 = vunpack.c.l.b16 %v1560
    %v1696 = vunpack.c.l.b16 %v1561
    %v1697 = vunpack.c.l.b16 %v1562
    %v1698 = vunpack.c.l.b16 %v1563
    %v1699 = vunpack.c.l.b16 %v1564
    %v1700 = vunpack.c.l.b16 %v1565
    %v1701 = vunpack.c.l.b16 %v1566
    %v1702 = vunpack.c.l.b16 %v1567
    %v1703 = vunpack.c.l.b16 %v1568
    %v1704 = vunpack.c.l.b16 %v1569
    %v1705 = vunpack.c.l.b16 %v1570
    %v1706 = vunpack.c.l.b16 %v1571
    %v1707 = vunpack.c.l.b16 %v1572
    %v1708 = vunpack.c.l.b16 %v1573
    %v1709 = vunpack.c.l.b16 %v1574
    %v1710 = vunpack.c.l.b16 %v1575
    %v1711 = vunpack.c.l.b16 %v1576
    %v1712 = vunpack.c.l.b16 %v1577
    %v1713 = vunpack.c.l.b16 %v1578
    %v1714 = vunpack.c.l.b16 %v1579
    %v1715 = vunpack.c.l.b16 %v1580
    %v1716 = vunpack.c.l.b16 %v1581
    %v1717 = vunpack.c.l.b16 %v1582
    %v1718 = vunpack.c.l.b16 %v1583
    %v1719 = vunpack.c.l.b16 %v1584
    %v1720 = vunpack.c.l.b16 %v1585
    %v1721 = vunpack.c.l.b16 %v1586
    %v1722 = vunpack.c.l.b16 %v1587
    %v1723 = vunpack.c.l.b16 %v1588
    %v1724 = vunpack.c.l.b16 %v1589
    %v1725 = vunpack.c.l.b16 %v1590
    %v1726 = vunpack.c.l.b16 %v1591
    %v1727 = vunpack.c.l.b16 %v1592
    %v1728 = vunpack.c.l.b16 %v1593
    %v1729 = vunpack.c.l.b16 %v1594
    %v1730 = vunpack.c.l.b16 %v1595
    %v1731 = vunpack.c.l.b16 %v1596
    %v1732 = vunpack.c.l.b16 %v1597
    %v1733 = vunpack.c.l.b16 %v1598
    %v1734 = vunpack.c.l.b16 %v1599
    %v1735 = vunpack.c.l.b16 %v1600
    %v1736 = vunpack.c.l.b16 %v1601
    %v1737 = vunpack.c.l.b16 %v1602
    %v1738 = vpack.c.b16 %v1675, %v1674
    %v1739 = vpack.c.b16 %v1677, %v1676
    %v1740 = vpack.c.b16 %v1679, %v1678
    %v1741 = vpack.c.b16 %v1681, %v1680
    %v1742 = vpack.c.b16 %v1683, %v1682
    %v1743 = vpack.c.b16 %v1685, %v1684
    %v1744 = vpack.c.b16 %v1687, %v1686
    %v1745 = vpack.c.b16 %v1689, %v1688
    %v1746 = vpack.c.b16 %v1691, %v1690
    %v1747 = vpack.c.b16 %v1693, %v1692
    %v1748 = vpack.c.b16 %v1695, %v1694
    %v1749 = vpack.c.b16 %v1697, %v1696
    %v1750 = vpack.c.b16 %v1699, %v1698
    %v1751 = vpack.c.b16 %v1701, %v1700
    %v1752 = vpack.c.b16 %v1703, %v1702
    %v1753 = vpack.c.b16 %v1705, %v1704
    %v1754 = vpack.c.b16 %v1707, %v1706
    %v1755 = vpack.c.b16 %v1709, %v1708
    %v1756 = vpack.c.b16 %v1711, %v1710
    %v1757 = vpack.c.b16 %v1713, %v1712
    %v1758 = vpack.c.b16 %v1715, %v1714
    %v1759 = vpack.c.b16 %v1717, %v1716
    %v1760 = vpack.c.b16 %v1719, %v1718
    %v1761 = vpack.c.b16 %v1721, %v1720
    %v1762 = vpack.c.b16 %v1723, %v1722
    %v1763 = vpack.c.b16 %v1725, %v1724
    %v1764 = vpack.c.b16 %v1727, %v1726
    %v1765 = vpack.c.b16 %v1729, %v1728
    %v1766 = vpack.c.b16 %v1731, %v1730
    %v1767 = vpack.c.b16 %v1733, %v1732
    %v1768 = vpack.c.b16 %v1735, %v1734
    %v1769 = vpack.c.b16 %v1737, %v1736
    %1802 = vmatprep.subr.bf16.mxu0 0
    %1803 = vmatpush1.bf16.msra.mxu0 %v1745
    %1804 = vmatprep.subr.bf16.mxu0 0
    %1805 = vmatpush1.bf16.msra.mxu0 %v1744
    %1806 = vmatprep.subr.bf16.mxu0 0
    %1807 = vmatpush1.bf16.msra.mxu0 %v1743
    %1808 = vmatprep.subr.bf16.mxu0 0
    %1809 = vmatpush1.bf16.msra.mxu0 %v1742
    %1810 = vmatprep.subr.bf16.mxu0 0
    %1811 = vmatpush1.bf16.msra.mxu0 %v1741
    %1812 = vmatprep.subr.bf16.mxu0 0
    %1813 = vmatpush1.bf16.msra.mxu0 %v1740
    %1814 = vmatprep.subr.bf16.mxu0 0
    %1815 = vmatpush1.bf16.msra.mxu0 %v1739
    %1816 = vmatprep.subr.bf16.mxu0 0
    %1817 = vmatpush1.bf16.msra.mxu0 %v1738
    %1818 = vmatprep.subr.bf16.mxu0 0
    %1819 = vmatpush2.bf16.msra.mxu0 %v1753
    %1820 = vmatprep.subr.bf16.mxu0 0
    %1821 = vmatpush2.bf16.msra.mxu0 %v1752
    %1822 = vmatprep.subr.bf16.mxu0 0
    %1823 = vmatpush2.bf16.msra.mxu0 %v1751
    %1824 = vmatprep.subr.bf16.mxu0 0
    %1825 = vmatpush2.bf16.msra.mxu0 %v1750
    %1826 = vmatprep.subr.bf16.mxu0 0
    %1827 = vmatpush2.bf16.msra.mxu0 %v1749
    %1828 = vmatprep.subr.bf16.mxu0 0
    %1829 = vmatpush2.bf16.msra.mxu0 %v1748
    %1830 = vmatprep.subr.bf16.mxu0 0
    %1831 = vmatpush2.bf16.msra.mxu0 %v1747
    %1832 = vmatprep.subr.bf16.mxu0 0
    %1833 = vmatpush2.bf16.msra.mxu0 %v1746
    %1834 = vmatprep.mubr.bf16.mxu0 %v1508
    %1835 = vmatmul.mubr.bf16.gmra.mxu0 %v1507
    %v1836 = vpop.f32.mrf.mxu0
    %v1837 = vadd.f32 %v1608, %v1836
    %v1838 = vpop.f32.mrf.mxu0
    %v1839 = vpop.f32.mrf.mxu0
    %v1840 = vadd.f32 %v1608, %v1839
    %v1841 = vpop.f32.mrf.mxu0
    %1842 = vmatprep.mubr.bf16.mxu0 %v1512
    %1843 = vmatmul.mubr.bf16.gmra.mxu0 %v1511
    %v1844 = vpop.f32.mrf.mxu0
    %v1845 = vadd.f32 %v1608, %v1844
    %v1846 = vpop.f32.mrf.mxu0
    %v1847 = vpop.f32.mrf.mxu0
    %v1848 = vadd.f32 %v1608, %v1847
    %v1849 = vpop.f32.mrf.mxu0
    %1850 = vmatprep.mubr.bf16.mxu0 %v1516
    %1851 = vmatmul.mubr.bf16.gmra.mxu0 %v1515
    %v1852 = vpop.f32.mrf.mxu0
    %v1853 = vadd.f32 %v1608, %v1852
    %v1854 = vpop.f32.mrf.mxu0
    %v1855 = vpop.f32.mrf.mxu0
    %v1856 = vadd.f32 %v1608, %v1855
    %v1857 = vpop.f32.mrf.mxu0
    %1858 = vmatprep.mubr.bf16.mxu0 %v1520
    %1859 = vmatmul.mubr.bf16.gmra.mxu0 %v1519
    %v1860 = vpop.f32.mrf.mxu0
    %v1861 = vadd.f32 %v1608, %v1860
    %v1862 = vpop.f32.mrf.mxu0
    %v1863 = vpop.f32.mrf.mxu0
    %v1864 = vadd.f32 %v1608, %v1863
    %v1865 = vpop.f32.mrf.mxu0
    %1866 = vmatprep.mubr.bf16.mxu0 %v1524
    %1867 = vmatmul.mubr.bf16.gmra.mxu0 %v1523
    %v1868 = vpop.f32.mrf.mxu0
    %v1869 = vadd.f32 %v1608, %v1868
    %v1870 = vpop.f32.mrf.mxu0
    %v1871 = vpop.f32.mrf.mxu0
    %v1872 = vadd.f32 %v1608, %v1871
    %v1873 = vpop.f32.mrf.mxu0
    %1874 = vmatprep.mubr.bf16.mxu0 %v1528
    %1875 = vmatmul.mubr.bf16.gmra.mxu0 %v1527
    %v1876 = vpop.f32.mrf.mxu0
    %v1877 = vadd.f32 %v1608, %v1876
    %v1878 = vpop.f32.mrf.mxu0
    %v1879 = vpop.f32.mrf.mxu0
    %v1880 = vadd.f32 %v1608, %v1879
    %v1881 = vpop.f32.mrf.mxu0
    %1882 = vmatprep.mubr.bf16.mxu0 %v1532
    %1883 = vmatmul.mubr.bf16.gmra.mxu0 %v1531
    %v1884 = vpop.f32.mrf.mxu0
    %v1885 = vadd.f32 %v1608, %v1884
    %v1886 = vpop.f32.mrf.mxu0
    %v1887 = vpop.f32.mrf.mxu0
    %v1888 = vadd.f32 %v1608, %v1887
    %v1889 = vpop.f32.mrf.mxu0
    %1890 = vmatprep.mubr.bf16.mxu0 %v1536
    %1891 = vmatmul.mubr.bf16.gmra.mxu0 %v1535
    %v1892 = vpop.f32.mrf.mxu0
    %v1893 = vadd.f32 %v1608, %v1892
    %v1894 = vpop.f32.mrf.mxu0
    %v1895 = vpop.f32.mrf.mxu0
    %v1896 = vadd.f32 %v1608, %v1895
    %v1897 = vpop.f32.mrf.mxu0
    %1898 = vdwg.mxu0
    %1899 = vmatprep.subr.bf16.mxu0 0
    %1900 = vmatpush1.bf16.msra.mxu0 %v1761
    %1901 = vmatprep.subr.bf16.mxu0 0
    %1902 = vmatpush1.bf16.msra.mxu0 %v1760
    %1903 = vmatprep.subr.bf16.mxu0 0
    %1904 = vmatpush1.bf16.msra.mxu0 %v1759
    %1905 = vmatprep.subr.bf16.mxu0 0
    %1906 = vmatpush1.bf16.msra.mxu0 %v1758
    %1907 = vmatprep.subr.bf16.mxu0 0
    %1908 = vmatpush1.bf16.msra.mxu0 %v1757
    %1909 = vmatprep.subr.bf16.mxu0 0
    %1910 = vmatpush1.bf16.msra.mxu0 %v1756
    %1911 = vmatprep.subr.bf16.mxu0 0
    %1912 = vmatpush1.bf16.msra.mxu0 %v1755
    %1913 = vmatprep.subr.bf16.mxu0 0
    %1914 = vmatpush1.bf16.msra.mxu0 %v1754
    %1915 = vmatprep.subr.bf16.mxu0 0
    %1916 = vmatpush2.bf16.msra.mxu0 %v1769
    %1917 = vmatprep.subr.bf16.mxu0 0
    %1918 = vmatpush2.bf16.msra.mxu0 %v1768
    %1919 = vmatprep.subr.bf16.mxu0 0
    %1920 = vmatpush2.bf16.msra.mxu0 %v1767
    %1921 = vmatprep.subr.bf16.mxu0 0
    %1922 = vmatpush2.bf16.msra.mxu0 %v1766
    %1923 = vmatprep.subr.bf16.mxu0 0
    %1924 = vmatpush2.bf16.msra.mxu0 %v1765
    %1925 = vmatprep.subr.bf16.mxu0 0
    %1926 = vmatpush2.bf16.msra.mxu0 %v1764
    %1927 = vmatprep.subr.bf16.mxu0 0
    %1928 = vmatpush2.bf16.msra.mxu0 %v1763
    %1929 = vmatprep.subr.bf16.mxu0 0
    %1930 = vmatpush2.bf16.msra.mxu0 %v1762
    %1931 = vmatprep.mubr.bf16.mxu0 %v1510
    %1932 = vmatmul.mubr.bf16.gmra.mxu0 %v1509
    %v1933 = vpop.f32.mrf.mxu0
    %v1934 = vadd.f32 %v1837, %v1933
    %v1935 = vpop.f32.mrf.mxu0
    %v1936 = vpop.f32.mrf.mxu0
    %v1937 = vadd.f32 %v1840, %v1936
    %v1938 = vpop.f32.mrf.mxu0
    %1939 = vmatprep.mubr.bf16.mxu0 %v1514
    %1940 = vmatmul.mubr.bf16.gmra.mxu0 %v1513
    %v1941 = vpop.f32.mrf.mxu0
    %v1942 = vadd.f32 %v1845, %v1941
    %v1943 = vpop.f32.mrf.mxu0
    %v1944 = vpop.f32.mrf.mxu0
    %v1945 = vadd.f32 %v1848, %v1944
    %v1946 = vpop.f32.mrf.mxu0
    %1947 = vmatprep.mubr.bf16.mxu0 %v1518
    %1948 = vmatmul.mubr.bf16.gmra.mxu0 %v1517
    %v1949 = vpop.f32.mrf.mxu0
    %v1950 = vadd.f32 %v1853, %v1949
    %v1951 = vpop.f32.mrf.mxu0
    %v1952 = vpop.f32.mrf.mxu0
    %v1953 = vadd.f32 %v1856, %v1952
    %v1954 = vpop.f32.mrf.mxu0
    %1955 = vmatprep.mubr.bf16.mxu0 %v1522
    %1956 = vmatmul.mubr.bf16.gmra.mxu0 %v1521
    %v1957 = vpop.f32.mrf.mxu0
    %v1958 = vadd.f32 %v1861, %v1957
    %v1959 = vpop.f32.mrf.mxu0
    %v1960 = vpop.f32.mrf.mxu0
    %v1961 = vadd.f32 %v1864, %v1960
    %v1962 = vpop.f32.mrf.mxu0
    %1963 = vmatprep.mubr.bf16.mxu0 %v1526
    %1964 = vmatmul.mubr.bf16.gmra.mxu0 %v1525
    %v1965 = vpop.f32.mrf.mxu0
    %v1966 = vadd.f32 %v1869, %v1965
    %v1967 = vpop.f32.mrf.mxu0
    %v1968 = vpop.f32.mrf.mxu0
    %v1969 = vadd.f32 %v1872, %v1968
    %v1970 = vpop.f32.mrf.mxu0
    %1971 = vmatprep.mubr.bf16.mxu0 %v1530
    %1972 = vmatmul.mubr.bf16.gmra.mxu0 %v1529
    %v1973 = vpop.f32.mrf.mxu0
    %v1974 = vadd.f32 %v1877, %v1973
    %v1975 = vpop.f32.mrf.mxu0
    %v1976 = vpop.f32.mrf.mxu0
    %v1977 = vadd.f32 %v1880, %v1976
    %v1978 = vpop.f32.mrf.mxu0
    %1979 = vmatprep.mubr.bf16.mxu0 %v1534
    %1980 = vmatmul.mubr.bf16.gmra.mxu0 %v1533
    %v1981 = vpop.f32.mrf.mxu0
    %v1982 = vadd.f32 %v1885, %v1981
    %v1983 = vpop.f32.mrf.mxu0
    %v1984 = vpop.f32.mrf.mxu0
    %v1985 = vadd.f32 %v1888, %v1984
    %v1986 = vpop.f32.mrf.mxu0
    %1987 = vmatprep.mubr.bf16.mxu0 %v1538
    %1988 = vmatmul.mubr.bf16.gmra.mxu0 %v1537
    %v1989 = vpop.f32.mrf.mxu0
    %v1990 = vadd.f32 %v1893, %v1989
    %v1991 = vpop.f32.mrf.mxu0
    %v1992 = vpop.f32.mrf.mxu0
    %v1993 = vadd.f32 %v1896, %v1992
    %v1994 = vpop.f32.mrf.mxu0
    %1995 = vdwg.mxu0
    %v1996 = vtanh.pop %v1934
    %v1997 = vtanh.pop %v1937
    %v1998 = vtanh.pop %v1942
    %v1999 = vtanh.pop %v1945
    %v2000 = vtanh.pop %v1950
    %v2001 = vtanh.pop %v1953
    %v2002 = vtanh.pop %v1958
    %v2003 = vtanh.pop %v1961
    %v2004 = vtanh.pop %v1966
    %v2005 = vtanh.pop %v1969
    %v2006 = vtanh.pop %v1974
    %v2007 = vtanh.pop %v1977
    %v2008 = vtanh.pop %v1982
    %v2009 = vtanh.pop %v1985
    %v2010 = vtanh.pop %v1990
    %v2011 = vtanh.pop %v1993
    %2012 = vst [vmem:[#allocation11] sm:$0xff] %v1996
    %2013 = vst [vmem:[#allocation11 + $0x8] sm:$0xff] %v1997
    %2014 = vst [vmem:[#allocation11 + $0x10] sm:$0xff] %v1998
    %2015 = vst [vmem:[#allocation11 + $0x18] sm:$0xff] %v1999
    %2016 = vst [vmem:[#allocation11 + $0x20] sm:$0xff] %v2000
    %2017 = vst [vmem:[#allocation11 + $0x28] sm:$0xff] %v2001
    %2018 = vst [vmem:[#allocation11 + $0x30] sm:$0xff] %v2002
    %2019 = vst [vmem:[#allocation11 + $0x38] sm:$0xff] %v2003
    %2020 = vst [vmem:[#allocation11 + $0x40] sm:$0xff] %v2004
    %2021 = vst [vmem:[#allocation11 + $0x48] sm:$0xff] %v2005
    %2022 = vst [vmem:[#allocation11 + $0x50] sm:$0xff] %v2006
    %2023 = vst [vmem:[#allocation11 + $0x58] sm:$0xff] %v2007
    %2024 = vst [vmem:[#allocation11 + $0x60] sm:$0xff] %v2008
    %2025 = vst [vmem:[#allocation11 + $0x68] sm:$0xff] %v2009
    %2026 = vst [vmem:[#allocation11 + $0x70] sm:$0xff] %v2010
    %2027 = vst [vmem:[#allocation11 + $0x78] sm:$0xff] %v2011
    // Predicated region
    $region58: #{tpu_custom_call.1} parent=1 // pred_check
      _
    $region59: #{tpu_custom_call.1} parent=1 // pred_check_branch
      %2029 = sbr.rel (0) target = $region61
    $region60: #{tpu_custom_call.1} parent=1 // pred_region
      %s2031 = ssub.s32 2048, 2048
      %2032 = vsyncadd [#allocation4], %s2031
      %s2033 = sshll.u32 [#allocation11], 4
      %s2034 = int_to_ptr.vmem [resolvable:$true] %s2033
      %2039 = dma.vmem_to_hbm [thread:$0]  %s2034, 2048, %s9, [#allocation4], 128, 128, 8
    $region61: #{tpu_custom_call.1} parent=1 // pred_fallthru
      _
    // Predicated region
    $region62: #{tpu_custom_call.1} parent=1 // pred_check
      _
    $region63: #{tpu_custom_call.1} parent=1 // pred_check_branch
      %2041 = sbr.rel (0) target = $region65
    $region64: #{tpu_custom_call.1} parent=1 // pred_region
      %2042 = dma.done [#allocation4], 2048
    $region65: #{tpu_custom_call.1} parent=1 // pred_fallthru
      _
    %2043 = vsyncpa [#allocation3], 1
    %2044 = vsyncpa [#allocation6], 1
    %2045 = vsyncpa [#allocation9], 1
    %2046 = vsyncpa [#allocation4], 1

</llo_original>
